<compile_context>
chip_gen: v5e
topology: v5e:2x2
jax: 0.10.0
libtpu: 0.0.40
codegen_flags: <defaults>
</compile_context>

<pallas_src>
import math
from functools import partial

import jax
import jax.numpy as jnp
from jax.experimental import pallas as pl
from jax.experimental.pallas import tpu as pltpu


ACT_DTYPE = jnp.bfloat16      # activations on the MXU
PARAM_DTYPE = jnp.bfloat16    # stored parameters


def _vmem_limit_bytes():
    """Per-generation scoped-VMEM budget (defaults of 16/32 MiB are too small
    for weight-resident tiles; keep headroom under v7x's 64 MiB physical)."""
    try:
        cap = getattr(pltpu.get_tpu_info(), "vmem_capacity_bytes", None)
        if cap:
            return min(int(cap) * 3 // 4, 100 * 1024 * 1024)
    except Exception:
        pass
    return 48 * 1024 * 1024


_VMEM_LIMIT = _vmem_limit_bytes()


def _mosaic(*sem):
    return pltpu.CompilerParams(dimension_semantics=sem,
                                vmem_limit_bytes=_VMEM_LIMIT)


# ----------------------------------------------------------------------------
# Fused  [LN] -> matmul (+bias) -> [GELU] -> [+residual]  kernel (block linears)
# ----------------------------------------------------------------------------

def _fused_linear_kernel(*refs, ln, has_bias, gelu, has_residual):
    it = iter(refs)
    x_ref = next(it)
    g_ref = next(it) if ln else None
    bb_ref = next(it) if ln else None
    w_ref = next(it)
    b_ref = next(it) if has_bias else None
    r_ref = next(it) if has_residual else None
    o_ref = next(it)

    x = x_ref[...]
    if ln:
        xf = x.astype(jnp.float32)
        mu = jnp.mean(xf, axis=-1, keepdims=True)
        xc = xf - mu
        var = jnp.mean(xc * xc, axis=-1, keepdims=True)
        xn = xc * jax.lax.rsqrt(var + 1e-5)           # eps matches nn.LayerNorm
        xn = xn * g_ref[...].astype(jnp.float32) + bb_ref[...].astype(jnp.float32)
        x = xn.astype(w_ref.dtype)                    # bf16 operands for the MXU

    acc = jnp.dot(x, w_ref[...], preferred_element_type=jnp.float32)

    if has_bias:
        acc = acc + b_ref[...].astype(jnp.float32)
    if gelu:
        # GELU(approximate='tanh'). Polynomial in f32 (VALU); tanh in bf16 so
        # the EUP runs at its bf16 rate on v6e/v7x (output is bf16 anyway).
        c = math.sqrt(2.0 / math.pi)
        u = c * (acc + 0.044715 * acc * acc * acc)
        t = jnp.tanh(u.astype(jnp.bfloat16)).astype(jnp.float32)
        acc = 0.5 * acc * (1.0 + t)
    if has_residual:
        acc = acc + r_ref[...].astype(jnp.float32)
    o_ref[...] = acc.astype(o_ref.dtype)


def fused_block_linear(x, w, b=None, *, ln_gamma=None, ln_beta=None,
                       residual=None, gelu=False, tm=512, out_dtype=None):
    """out = [+residual] [gelu]( [LN(x)] @ W + b ).

    x: (M, K); w: (K, N).  The weight BlockSpec has a constant index_map and a
    single column tile (tn = N), so the weight is DMA'd from HBM once per call
    and stays resident in VMEM; only rows are tiled.  K is never tiled (the LN
    prologue needs full rows and K <= 4*n_embd fits VMEM).
    """
    M, K = x.shape
    Kw, N = w.shape
    assert Kw == K
    out_dtype = out_dtype or x.dtype
    tm = min(tm, M)                       # small-M: one full-extent row block
    grid = (pl.cdiv(M, tm),)              # ragged last row tile handled by Pallas

    in_specs = [pl.BlockSpec((tm, K), lambda i: (i, 0))]
    args = [x]
    if ln_gamma is not None:
        in_specs += [pl.BlockSpec((1, K), lambda i: (0, 0)),
                     pl.BlockSpec((1, K), lambda i: (0, 0))]
        args += [ln_gamma.reshape(1, K), ln_beta.reshape(1, K)]
    in_specs.append(pl.BlockSpec((K, N), lambda i: (0, 0)))   # weight: fetched once
    args.append(w)
    if b is not None:
        in_specs.append(pl.BlockSpec((1, N), lambda i: (0, 0)))
        args.append(b.reshape(1, N))
    if residual is not None:
        in_specs.append(pl.BlockSpec((tm, N), lambda i: (i, 0)))
        args.append(residual)

    return pl.pallas_call(
        partial(_fused_linear_kernel, ln=ln_gamma is not None,
                has_bias=b is not None, gelu=gelu,
                has_residual=residual is not None),
        out_shape=jax.ShapeDtypeStruct((M, N), out_dtype),
        grid=grid,
        in_specs=in_specs,
        out_specs=pl.BlockSpec((tm, N), lambda i: (i, 0)),
        compiler_params=_mosaic("parallel"),
    )(*args)
    # TODO(synk): on v7x consider fp8 storage/compute for fc/mproj weights
    # (halves weight DMA, ~2x MXU throughput); not applicable on v5e/v6e.


# ----------------------------------------------------------------------------
# Standalone LayerNorm (final ln_f) -- computed once, not per vocab tile
# ----------------------------------------------------------------------------

def _layernorm_kernel(x_ref, g_ref, b_ref, o_ref):
    xf = x_ref[...].astype(jnp.float32)
    mu = jnp.mean(xf, axis=-1, keepdims=True)
    xc = xf - mu
    var = jnp.mean(xc * xc, axis=-1, keepdims=True)
    xn = xc * jax.lax.rsqrt(var + 1e-5)
    xn = xn * g_ref[...].astype(jnp.float32) + b_ref[...].astype(jnp.float32)
    o_ref[...] = xn.astype(o_ref.dtype)


def pallas_layernorm(x, gamma, beta, *, tm=512, out_dtype=ACT_DTYPE):
    M, K = x.shape
    tm = min(tm, M)
    return pl.pallas_call(
        _layernorm_kernel,
        out_shape=jax.ShapeDtypeStruct((M, K), out_dtype),
        grid=(pl.cdiv(M, tm),),
        in_specs=[pl.BlockSpec((tm, K), lambda i: (i, 0)),
                  pl.BlockSpec((1, K), lambda i: (0, 0)),
                  pl.BlockSpec((1, K), lambda i: (0, 0))],
        out_specs=pl.BlockSpec((tm, K), lambda i: (i, 0)),
        compiler_params=_mosaic("parallel"),
    )(x, gamma.reshape(1, K), beta.reshape(1, K))


# ----------------------------------------------------------------------------
# LM head: vocab-outer grid streams the tied (C, V) weight from HBM exactly once
# ----------------------------------------------------------------------------

def _lm_head_kernel(x_ref, w_ref, o_ref):
    o_ref[...] = jnp.dot(x_ref[...], w_ref[...],
                         preferred_element_type=jnp.float32).astype(o_ref.dtype)


def pallas_lm_head(xn, w, *, tm=1024, tn=512):
    """logits = xn @ w with w = wte.T (C, V), pre-transposed once at init.

    Grid is (vocab OUTER, rows inner): the weight block index is constant
    across the inner row loop, so each vocab tile of the large weight is DMA'd
    exactly once (the weight is streamed from HBM once per call); the small
    already-normalized bf16 activation slab is the only array re-read.
    """
    M, C = xn.shape
    Cw, V = w.shape
    assert Cw == C
    tm = min(tm, M)
    tn = min(tn, V)
    grid = (pl.cdiv(V, tn), pl.cdiv(M, tm))
    return pl.pallas_call(
        _lm_head_kernel,
        out_shape=jax.ShapeDtypeStruct((M, V), jnp.float32),
        grid=grid,
        in_specs=[pl.BlockSpec((tm, C), lambda j, i: (i, 0)),
                  pl.BlockSpec((C, tn), lambda j, i: (0, j))],
        out_specs=pl.BlockSpec((tm, tn), lambda j, i: (i, j)),
        compiler_params=_mosaic("parallel", "parallel"),
    )(xn, w)


# ----------------------------------------------------------------------------
# Causal self-attention kernel (packed qkv, lane-dense single output store)
# ----------------------------------------------------------------------------

def _attention_kernel(qkv_ref, o_ref, *, H, hd, scale):
    # qkv_ref block: (1, T, 3*C) packed [q|k|v]; o_ref block: (1, T, C), C = H*hd.
    T = qkv_ref.shape[1]
    C = H * hd
    row = jax.lax.broadcasted_iota(jnp.int32, (T, T), 0)
    col = jax.lax.broadcasted_iota(jnp.int32, (T, T), 1)
    causal = col <= row

    outs = []
    for h in range(H):                                  # static head loop
        q = qkv_ref[0, :, h * hd:(h + 1) * hd]          # (T, hd) bf16
        k = qkv_ref[0, :, C + h * hd:C + (h + 1) * hd]
        v = qkv_ref[0, :, 2 * C + h * hd:2 * C + (h + 1) * hd]
        s = jax.lax.dot_general(q, k, (((1,), (1,)), ((), ())),
                                preferred_element_type=jnp.float32) * scale
        s = jnp.where(causal, s, -1e30)                 # finite, NaN-safe mask (f32)
        s = s - jnp.max(s, axis=-1, keepdims=True)
        p = jnp.exp(s)
        p = p * pl.reciprocal(jnp.sum(p, axis=-1, keepdims=True), approx=False)
        outs.append(jnp.dot(p.astype(v.dtype), v, preferred_element_type=jnp.float32))
    # One lane-dense (T, C) store instead of 64-lane masked stores per head.
    o_ref[0, :, :] = jnp.concatenate(outs, axis=-1).astype(o_ref.dtype)
    # TODO(synk): for production block_size (>=1024), switch to a flash-style
    # KV-tiled online softmax with additional grid axes over heads/query
    # blocks (bounds (T,T) score live ranges, skips masked causal work, keeps
    # per-program VMEM under v7x's 64 MiB and feeds both TensorCores at small
    # batch), and pack 2+ heads per MXU matmul to raise MXU utilization.


def pallas_causal_attention(qkv, H, hd):
    """qkv: (B, T, 3*C) packed [q|k|v] -> (B, T, C). scale = 1/sqrt(hd) as SDPA."""
    B, T, threeC = qkv.shape
    C = H * hd
    assert threeC == 3 * C
    return pl.pallas_call(
        partial(_attention_kernel, H=H, hd=hd, scale=1.0 / math.sqrt(hd)),
        out_shape=jax.ShapeDtypeStruct((B, T, C), qkv.dtype),
        grid=(B,),
        in_specs=[pl.BlockSpec((1, T, threeC), lambda b: (b, 0, 0))],
        out_specs=pl.BlockSpec((1, T, C), lambda b: (b, 0, 0)),
        compiler_params=_mosaic("parallel"),
    )(qkv)


# ----------------------------------------------------------------------------
# Parameter initialization (mirrors GPT._init_weights; stored bf16)
# ----------------------------------------------------------------------------

def init_params(key, cfg):
    C, V, L, BS = cfg["n_embd"], cfg["vocab_size"], cfg["n_layer"], cfg["block_size"]
    std = 0.02
    proj_std = (2 * L) ** -0.5  # NANOGPT_SCALE_INIT
    keys = iter(jax.random.split(key, 4 + 4 * L))

    def normal(k, shape, s):
        return (s * jax.random.normal(k, shape)).astype(PARAM_DTYPE)

    wte = normal(next(keys), (V, C), std)              # tied with lm_head
    params = {
        "wte": wte,
        "lm_head_w": wte.T,        # tied weight pre-transposed once to (C, V)
        "wpe": normal(next(keys), (BS, C), std),
        "lnf_g": jnp.ones((C,), PARAM_DTYPE),
        "lnf_b": jnp.zeros((C,), PARAM_DTYPE),
        "blocks": [],
    }
    for _ in range(L):
        params["blocks"].append({
            "ln1_g": jnp.ones((C,), PARAM_DTYPE),
            "ln1_b": jnp.zeros((C,), PARAM_DTYPE),
            "attn_w": normal(next(keys), (C, 3 * C), std),
            "attn_b": jnp.zeros((3 * C,), PARAM_DTYPE),
            "proj_w": normal(next(keys), (C, C), proj_std),
            "proj_b": jnp.zeros((C,), PARAM_DTYPE),
            "ln2_g": jnp.ones((C,), PARAM_DTYPE),
            "ln2_b": jnp.zeros((C,), PARAM_DTYPE),
            "fc_w": normal(next(keys), (C, 4 * C), std),
            "fc_b": jnp.zeros((4 * C,), PARAM_DTYPE),
            "mproj_w": normal(next(keys), (4 * C, C), proj_std),
            "mproj_b": jnp.zeros((C,), PARAM_DTYPE),
        })
    return params


# ----------------------------------------------------------------------------
# GPT forward (targets=None path; returns logits)
# ----------------------------------------------------------------------------

def gpt_forward(idx, params, cfg):
    B, T = idx.shape
    C, H = cfg["n_embd"], cfg["n_head"]
    hd = C // H
    assert T <= cfg["block_size"]

    tok_emb = jnp.take(params["wte"], idx, axis=0)          # (B, T, C) gather glue
    pos_emb = params["wpe"][:T]
    x = (tok_emb + pos_emb[None, :, :]).reshape(B * T, C).astype(ACT_DTYPE)

    for lp in params["blocks"]:
        # --- attention branch: LN1 fused into qkv linear; residual fused into proj
        qkv = fused_block_linear(x, lp["attn_w"], lp["attn_b"],
                                 ln_gamma=lp["ln1_g"], ln_beta=lp["ln1_b"])
        att = pallas_causal_attention(qkv.reshape(B, T, 3 * C), H, hd)
        x = fused_block_linear(att.reshape(B * T, C), lp["proj_w"], lp["proj_b"],
                               residual=x)

        # --- MLP branch: LN2 + GELU fused into c_fc; residual fused into c_proj
        h = fused_block_linear(x, lp["fc_w"], lp["fc_b"],
                               ln_gamma=lp["ln2_g"], ln_beta=lp["ln2_b"], gelu=True)
        x = fused_block_linear(h, lp["mproj_w"], lp["mproj_b"], residual=x)

    # final LN computed exactly once (not per vocab tile), then the tied LM
    # head contracts the pre-transposed (C, V) weight, streamed from HBM once.
    xn = pallas_layernorm(x, params["lnf_g"], params["lnf_b"])
    logits = pallas_lm_head(xn, params["lm_head_w"])
    # TODO(synk): cross-entropy loss path (targets != None) not implemented;
    # forward returns logits only.
    return logits.reshape(B, T, -1)


# ----------------------------------------------------------------------------
# Main
# ----------------------------------------------------------------------------

if __name__ == "__main__":
    cfg = dict(block_size=16, vocab_size=128, n_layer=2, n_head=4, n_embd=32)
    B, T = 2, 8

    key = jax.random.PRNGKey(0)
    pkey, ikey = jax.random.split(key)
    params = init_params(pkey, cfg)
    idx = jax.random.randint(ikey, (B, T), 0, cfg["vocab_size"], dtype=jnp.int32)

    logits = jax.jit(partial(gpt_forward, cfg=cfg))(idx, params)
    logits = jax.block_until_ready(logits)

    assert logits.shape == (B, T, cfg["vocab_size"])
    assert bool(jnp.all(jnp.isfinite(logits)))
    print("KERNEL_OK")
</pallas_src>

<mosaic_0001>
module attributes {stable_mosaic.version = 11 : i64} {
  func.func @_fused_linear_kernel(%arg0: i32, %arg1: memref<16x32xbf16, #tpu.memory_space<vmem>>, %arg2: memref<1x32xbf16, #tpu.memory_space<vmem>>, %arg3: memref<1x32xbf16, #tpu.memory_space<vmem>>, %arg4: memref<32x96xbf16, #tpu.memory_space<vmem>>, %arg5: memref<1x96xbf16, #tpu.memory_space<vmem>>, %arg6: memref<16x96xbf16, #tpu.memory_space<vmem>>) attributes {dimension_semantics = [#tpu.dimension_semantics<parallel>], iteration_bounds = array<i64: 1>, scalar_prefetch = 0 : i64, scratch_operands = 0 : i64, tpu.core_type = #tpu.core_type<tc>, window_params = [{transform_indices = @transform_0, window_bounds = array<i64: 16, 32>}, {pipeline_mode = #tpu.pipeline_mode<synchronous>, transform_indices = @transform_1, window_bounds = array<i64: 1, 32>}, {pipeline_mode = #tpu.pipeline_mode<synchronous>, transform_indices = @transform_2, window_bounds = array<i64: 1, 32>}, {pipeline_mode = #tpu.pipeline_mode<synchronous>, transform_indices = @transform_3, window_bounds = array<i64: 32, 96>}, {pipeline_mode = #tpu.pipeline_mode<synchronous>, transform_indices = @transform_4, window_bounds = array<i64: 1, 96>}, {transform_indices = @transform_5, window_bounds = array<i64: 16, 96>}]} {
    %c0 = arith.constant 0 : index
    %c0_0 = arith.constant 0 : index
    %0 = vector.load %arg1[%c0, %c0_0] : memref<16x32xbf16, #tpu.memory_space<vmem>>, vector<16x32xbf16>
    %1 = arith.extf %0 : vector<16x32xbf16> to vector<16x32xf32>
    %cst = arith.constant dense<0.000000e+00> : vector<16xf32>
    %2 = vector.multi_reduction <add>, %1, %cst [1] : vector<16x32xf32> to vector<16xf32>
    %3 = vector.shape_cast %2 : vector<16xf32> to vector<16x1xf32>
    %cst_1 = arith.constant 3.200000e+01 : f32
    %4 = vector.broadcast %cst_1 : f32 to vector<16x1xf32>
    %5 = arith.divf %3, %4 : vector<16x1xf32>
    %6 = vector.broadcast %5 : vector<16x1xf32> to vector<16x32xf32>
    %7 = arith.subf %1, %6 : vector<16x32xf32>
    %8 = arith.mulf %7, %7 : vector<16x32xf32>
    %cst_2 = arith.constant dense<0.000000e+00> : vector<16xf32>
    %9 = vector.multi_reduction <add>, %8, %cst_2 [1] : vector<16x32xf32> to vector<16xf32>
    %10 = vector.shape_cast %9 : vector<16xf32> to vector<16x1xf32>
    %cst_3 = arith.constant 3.200000e+01 : f32
    %11 = vector.broadcast %cst_3 : f32 to vector<16x1xf32>
    %12 = arith.divf %10, %11 : vector<16x1xf32>
    %cst_4 = arith.constant 9.99999974E-6 : f32
    %13 = vector.broadcast %cst_4 : f32 to vector<16x1xf32>
    %14 = arith.addf %12, %13 : vector<16x1xf32>
    %15 = math.rsqrt %14 : vector<16x1xf32>
    %16 = vector.broadcast %15 : vector<16x1xf32> to vector<16x32xf32>
    %17 = arith.mulf %7, %16 : vector<16x32xf32>
    %c0_5 = arith.constant 0 : index
    %c0_6 = arith.constant 0 : index
    %18 = vector.load %arg2[%c0_5, %c0_6] : memref<1x32xbf16, #tpu.memory_space<vmem>>, vector<1x32xbf16>
    %19 = arith.extf %18 : vector<1x32xbf16> to vector<1x32xf32>
    %20 = vector.broadcast %19 : vector<1x32xf32> to vector<16x32xf32>
    %21 = arith.mulf %17, %20 : vector<16x32xf32>
    %c0_7 = arith.constant 0 : index
    %c0_8 = arith.constant 0 : index
    %22 = vector.load %arg3[%c0_7, %c0_8] : memref<1x32xbf16, #tpu.memory_space<vmem>>, vector<1x32xbf16>
    %23 = arith.extf %22 : vector<1x32xbf16> to vector<1x32xf32>
    %24 = vector.broadcast %23 : vector<1x32xf32> to vector<16x32xf32>
    %25 = arith.addf %21, %24 : vector<16x32xf32>
    %26 = arith.truncf %25 : vector<16x32xf32> to vector<16x32xbf16>
    %c0_9 = arith.constant 0 : index
    %c0_10 = arith.constant 0 : index
    %27 = vector.load %arg4[%c0_9, %c0_10] : memref<32x96xbf16, #tpu.memory_space<vmem>>, vector<32x96xbf16>
    %cst_11 = arith.constant dense<0.000000e+00> : vector<16x96xf32>
    %28 = tpu.matmul %26, %27, %cst_11 {dimension_numbers = #tpu.dot_dimension_numbers<[1], [0], [0], [1], [0, 0, 1, 1], [], []>} : vector<16x32xbf16>, vector<32x96xbf16>, vector<16x96xf32> -> vector<16x96xf32>
    %c0_12 = arith.constant 0 : index
    %c0_13 = arith.constant 0 : index
    %29 = vector.load %arg5[%c0_12, %c0_13] : memref<1x96xbf16, #tpu.memory_space<vmem>>, vector<1x96xbf16>
    %30 = arith.extf %29 : vector<1x96xbf16> to vector<1x96xf32>
    %31 = vector.broadcast %30 : vector<1x96xf32> to vector<16x96xf32>
    %32 = arith.addf %28, %31 : vector<16x96xf32>
    %33 = arith.truncf %32 : vector<16x96xf32> to vector<16x96xbf16>
    %c0_14 = arith.constant 0 : index
    %c0_15 = arith.constant 0 : index
    %34 = vector.load %arg6[%c0_14, %c0_15] : memref<16x96xbf16, #tpu.memory_space<vmem>>, vector<16x96xbf16>
    tpu.vector_store %arg6[%c0_14, %c0_15], %33 {strides = array<i32>} : memref<16x96xbf16, #tpu.memory_space<vmem>>, vector<16x96xbf16>,
    return
  }
  func.func @transform_0(%arg0: i32) -> (i32, i32) {
    %c0_i32 = arith.constant 0 : i32
    %c0_i32_0 = arith.constant 0 : i32
    return %arg0, %c0_i32 : i32, i32
  }
  func.func @transform_1(%arg0: i32) -> (i32, i32) {
    %c0_i32 = arith.constant 0 : i32
    %c0_i32_0 = arith.constant 0 : i32
    %c0_i32_1 = arith.constant 0 : i32
    return %c0_i32, %c0_i32_0 : i32, i32
  }
  func.func @transform_2(%arg0: i32) -> (i32, i32) {
    %c0_i32 = arith.constant 0 : i32
    %c0_i32_0 = arith.constant 0 : i32
    %c0_i32_1 = arith.constant 0 : i32
    return %c0_i32, %c0_i32_0 : i32, i32
  }
  func.func @transform_3(%arg0: i32) -> (i32, i32) {
    %c0_i32 = arith.constant 0 : i32
    %c0_i32_0 = arith.constant 0 : i32
    %c0_i32_1 = arith.constant 0 : i32
    return %c0_i32, %c0_i32_0 : i32, i32
  }
  func.func @transform_4(%arg0: i32) -> (i32, i32) {
    %c0_i32 = arith.constant 0 : i32
    %c0_i32_0 = arith.constant 0 : i32
    %c0_i32_1 = arith.constant 0 : i32
    return %c0_i32, %c0_i32_0 : i32, i32
  }
  func.func @transform_5(%arg0: i32) -> (i32, i32) {
    %c0_i32 = arith.constant 0 : i32
    %c0_i32_0 = arith.constant 0 : i32
    return %arg0, %c0_i32 : i32, i32
  }
}

module attributes {stable_mosaic.version = 11 : i64} {
  func.func @_fused_linear_kernel(%arg0: i32, %arg1: memref<16x32xbf16, #tpu.memory_space<vmem>>, %arg2: memref<32x32xbf16, #tpu.memory_space<vmem>>, %arg3: memref<1x32xbf16, #tpu.memory_space<vmem>>, %arg4: memref<16x32xbf16, #tpu.memory_space<vmem>>, %arg5: memref<16x32xbf16, #tpu.memory_space<vmem>>) attributes {dimension_semantics = [#tpu.dimension_semantics<parallel>], iteration_bounds = array<i64: 1>, scalar_prefetch = 0 : i64, scratch_operands = 0 : i64, tpu.core_type = #tpu.core_type<tc>, window_params = [{transform_indices = @transform_0, window_bounds = array<i64: 16, 32>}, {pipeline_mode = #tpu.pipeline_mode<synchronous>, transform_indices = @transform_1, window_bounds = array<i64: 32, 32>}, {pipeline_mode = #tpu.pipeline_mode<synchronous>, transform_indices = @transform_2, window_bounds = array<i64: 1, 32>}, {transform_indices = @transform_3, window_bounds = array<i64: 16, 32>}, {transform_indices = @transform_4, window_bounds = array<i64: 16, 32>}]} {
    %c0 = arith.constant 0 : index
    %c0_0 = arith.constant 0 : index
    %0 = vector.load %arg1[%c0, %c0_0] : memref<16x32xbf16, #tpu.memory_space<vmem>>, vector<16x32xbf16>
    %c0_1 = arith.constant 0 : index
    %c0_2 = arith.constant 0 : index
    %1 = vector.load %arg2[%c0_1, %c0_2] : memref<32x32xbf16, #tpu.memory_space<vmem>>, vector<32x32xbf16>
    %cst = arith.constant dense<0.000000e+00> : vector<16x32xf32>
    %2 = tpu.matmul %0, %1, %cst {dimension_numbers = #tpu.dot_dimension_numbers<[1], [0], [0], [1], [0, 0, 1, 1], [], []>} : vector<16x32xbf16>, vector<32x32xbf16>, vector<16x32xf32> -> vector<16x32xf32>
    %c0_3 = arith.constant 0 : index
    %c0_4 = arith.constant 0 : index
    %3 = vector.load %arg3[%c0_3, %c0_4] : memref<1x32xbf16, #tpu.memory_space<vmem>>, vector<1x32xbf16>
    %4 = arith.extf %3 : vector<1x32xbf16> to vector<1x32xf32>
    %5 = vector.broadcast %4 : vector<1x32xf32> to vector<16x32xf32>
    %6 = arith.addf %2, %5 : vector<16x32xf32>
    %c0_5 = arith.constant 0 : index
    %c0_6 = arith.constant 0 : index
    %7 = vector.load %arg4[%c0_5, %c0_6] : memref<16x32xbf16, #tpu.memory_space<vmem>>, vector<16x32xbf16>
    %8 = arith.extf %7 : vector<16x32xbf16> to vector<16x32xf32>
    %9 = arith.addf %6, %8 : vector<16x32xf32>
    %10 = arith.truncf %9 : vector<16x32xf32> to vector<16x32xbf16>
    %c0_7 = arith.constant 0 : index
    %c0_8 = arith.constant 0 : index
    %11 = vector.load %arg5[%c0_7, %c0_8] : memref<16x32xbf16, #tpu.memory_space<vmem>>, vector<16x32xbf16>
    tpu.vector_store %arg5[%c0_7, %c0_8], %10 {strides = array<i32>} : memref<16x32xbf16, #tpu.memory_space<vmem>>, vector<16x32xbf16>,
    return
  }
  func.func @transform_0(%arg0: i32) -> (i32, i32) {
    %c0_i32 = arith.constant 0 : i32
    %c0_i32_0 = arith.constant 0 : i32
    return %arg0, %c0_i32 : i32, i32
  }
  func.func @transform_1(%arg0: i32) -> (i32, i32) {
    %c0_i32 = arith.constant 0 : i32
    %c0_i32_0 = arith.constant 0 : i32
    %c0_i32_1 = arith.constant 0 : i32
    return %c0_i32, %c0_i32_0 : i32, i32
  }
  func.func @transform_2(%arg0: i32) -> (i32, i32) {
    %c0_i32 = arith.constant 0 : i32
    %c0_i32_0 = arith.constant 0 : i32
    %c0_i32_1 = arith.constant 0 : i32
    return %c0_i32, %c0_i32_0 : i32, i32
  }
  func.func @transform_3(%arg0: i32) -> (i32, i32) {
    %c0_i32 = arith.constant 0 : i32
    %c0_i32_0 = arith.constant 0 : i32
    return %arg0, %c0_i32 : i32, i32
  }
  func.func @transform_4(%arg0: i32) -> (i32, i32) {
    %c0_i32 = arith.constant 0 : i32
    %c0_i32_0 = arith.constant 0 : i32
    return %arg0, %c0_i32 : i32, i32
  }
}

module attributes {stable_mosaic.version = 11 : i64} {
  func.func @_fused_linear_kernel(%arg0: i32, %arg1: memref<16x32xbf16, #tpu.memory_space<vmem>>, %arg2: memref<1x32xbf16, #tpu.memory_space<vmem>>, %arg3: memref<1x32xbf16, #tpu.memory_space<vmem>>, %arg4: memref<32x128xbf16, #tpu.memory_space<vmem>>, %arg5: memref<1x128xbf16, #tpu.memory_space<vmem>>, %arg6: memref<16x128xbf16, #tpu.memory_space<vmem>>) attributes {dimension_semantics = [#tpu.dimension_semantics<parallel>], iteration_bounds = array<i64: 1>, scalar_prefetch = 0 : i64, scratch_operands = 0 : i64, tpu.core_type = #tpu.core_type<tc>, window_params = [{transform_indices = @transform_0, window_bounds = array<i64: 16, 32>}, {pipeline_mode = #tpu.pipeline_mode<synchronous>, transform_indices = @transform_1, window_bounds = array<i64: 1, 32>}, {pipeline_mode = #tpu.pipeline_mode<synchronous>, transform_indices = @transform_2, window_bounds = array<i64: 1, 32>}, {pipeline_mode = #tpu.pipeline_mode<synchronous>, transform_indices = @transform_3, window_bounds = array<i64: 32, 128>}, {pipeline_mode = #tpu.pipeline_mode<synchronous>, transform_indices = @transform_4, window_bounds = array<i64: 1, 128>}, {transform_indices = @transform_5, window_bounds = array<i64: 16, 128>}]} {
    %c0 = arith.constant 0 : index
    %c0_0 = arith.constant 0 : index
    %0 = vector.load %arg1[%c0, %c0_0] : memref<16x32xbf16, #tpu.memory_space<vmem>>, vector<16x32xbf16>
    %1 = arith.extf %0 : vector<16x32xbf16> to vector<16x32xf32>
    %cst = arith.constant dense<0.000000e+00> : vector<16xf32>
    %2 = vector.multi_reduction <add>, %1, %cst [1] : vector<16x32xf32> to vector<16xf32>
    %3 = vector.shape_cast %2 : vector<16xf32> to vector<16x1xf32>
    %cst_1 = arith.constant 3.200000e+01 : f32
    %4 = vector.broadcast %cst_1 : f32 to vector<16x1xf32>
    %5 = arith.divf %3, %4 : vector<16x1xf32>
    %6 = vector.broadcast %5 : vector<16x1xf32> to vector<16x32xf32>
    %7 = arith.subf %1, %6 : vector<16x32xf32>
    %8 = arith.mulf %7, %7 : vector<16x32xf32>
    %cst_2 = arith.constant dense<0.000000e+00> : vector<16xf32>
    %9 = vector.multi_reduction <add>, %8, %cst_2 [1] : vector<16x32xf32> to vector<16xf32>
    %10 = vector.shape_cast %9 : vector<16xf32> to vector<16x1xf32>
    %cst_3 = arith.constant 3.200000e+01 : f32
    %11 = vector.broadcast %cst_3 : f32 to vector<16x1xf32>
    %12 = arith.divf %10, %11 : vector<16x1xf32>
    %cst_4 = arith.constant 9.99999974E-6 : f32
    %13 = vector.broadcast %cst_4 : f32 to vector<16x1xf32>
    %14 = arith.addf %12, %13 : vector<16x1xf32>
    %15 = math.rsqrt %14 : vector<16x1xf32>
    %16 = vector.broadcast %15 : vector<16x1xf32> to vector<16x32xf32>
    %17 = arith.mulf %7, %16 : vector<16x32xf32>
    %c0_5 = arith.constant 0 : index
    %c0_6 = arith.constant 0 : index
    %18 = vector.load %arg2[%c0_5, %c0_6] : memref<1x32xbf16, #tpu.memory_space<vmem>>, vector<1x32xbf16>
    %19 = arith.extf %18 : vector<1x32xbf16> to vector<1x32xf32>
    %20 = vector.broadcast %19 : vector<1x32xf32> to vector<16x32xf32>
    %21 = arith.mulf %17, %20 : vector<16x32xf32>
    %c0_7 = arith.constant 0 : index
    %c0_8 = arith.constant 0 : index
    %22 = vector.load %arg3[%c0_7, %c0_8] : memref<1x32xbf16, #tpu.memory_space<vmem>>, vector<1x32xbf16>
    %23 = arith.extf %22 : vector<1x32xbf16> to vector<1x32xf32>
    %24 = vector.broadcast %23 : vector<1x32xf32> to vector<16x32xf32>
    %25 = arith.addf %21, %24 : vector<16x32xf32>
    %26 = arith.truncf %25 : vector<16x32xf32> to vector<16x32xbf16>
    %c0_9 = arith.constant 0 : index
    %c0_10 = arith.constant 0 : index
    %27 = vector.load %arg4[%c0_9, %c0_10] : memref<32x128xbf16, #tpu.memory_space<vmem>>, vector<32x128xbf16>
    %cst_11 = arith.constant dense<0.000000e+00> : vector<16x128xf32>
    %28 = tpu.matmul %26, %27, %cst_11 {dimension_numbers = #tpu.dot_dimension_numbers<[1], [0], [0], [1], [0, 0, 1, 1], [], []>} : vector<16x32xbf16>, vector<32x128xbf16>, vector<16x128xf32> -> vector<16x128xf32>
    %c0_12 = arith.constant 0 : index
    %c0_13 = arith.constant 0 : index
    %29 = vector.load %arg5[%c0_12, %c0_13] : memref<1x128xbf16, #tpu.memory_space<vmem>>, vector<1x128xbf16>
    %30 = arith.extf %29 : vector<1x128xbf16> to vector<1x128xf32>
    %31 = vector.broadcast %30 : vector<1x128xf32> to vector<16x128xf32>
    %32 = arith.addf %28, %31 : vector<16x128xf32>
    %cst_14 = arith.constant 4.471500e-02 : f32
    %33 = vector.broadcast %cst_14 : f32 to vector<16x128xf32>
    %34 = arith.mulf %33, %32 : vector<16x128xf32>
    %35 = arith.mulf %34, %32 : vector<16x128xf32>
    %36 = arith.mulf %35, %32 : vector<16x128xf32>
    %37 = arith.addf %32, %36 : vector<16x128xf32>
    %cst_15 = arith.constant 0.797884583 : f32
    %38 = vector.broadcast %cst_15 : f32 to vector<16x128xf32>
    %39 = arith.mulf %38, %37 : vector<16x128xf32>
    %40 = arith.truncf %39 : vector<16x128xf32> to vector<16x128xbf16>
    %41 = math.tanh %40 : vector<16x128xbf16>
    %42 = arith.extf %41 : vector<16x128xbf16> to vector<16x128xf32>
    %cst_16 = arith.constant 5.000000e-01 : f32
    %43 = vector.broadcast %cst_16 : f32 to vector<16x128xf32>
    %44 = arith.mulf %43, %32 : vector<16x128xf32>
    %cst_17 = arith.constant 1.000000e+00 : f32
    %45 = vector.broadcast %cst_17 : f32 to vector<16x128xf32>
    %46 = arith.addf %45, %42 : vector<16x128xf32>
    %47 = arith.mulf %44, %46 : vector<16x128xf32>
    %48 = arith.truncf %47 : vector<16x128xf32> to vector<16x128xbf16>
    %c0_18 = arith.constant 0 : index
    %c0_19 = arith.constant 0 : index
    %49 = vector.load %arg6[%c0_18, %c0_19] : memref<16x128xbf16, #tpu.memory_space<vmem>>, vector<16x128xbf16>
    tpu.vector_store %arg6[%c0_18, %c0_19], %48 {strides = array<i32>} : memref<16x128xbf16, #tpu.memory_space<vmem>>, vector<16x128xbf16>,
    return
  }
  func.func @transform_0(%arg0: i32) -> (i32, i32) {
    %c0_i32 = arith.constant 0 : i32
    %c0_i32_0 = arith.constant 0 : i32
    return %arg0, %c0_i32 : i32, i32
  }
  func.func @transform_1(%arg0: i32) -> (i32, i32) {
    %c0_i32 = arith.constant 0 : i32
    %c0_i32_0 = arith.constant 0 : i32
    %c0_i32_1 = arith.constant 0 : i32
    return %c0_i32, %c0_i32_0 : i32, i32
  }
  func.func @transform_2(%arg0: i32) -> (i32, i32) {
    %c0_i32 = arith.constant 0 : i32
    %c0_i32_0 = arith.constant 0 : i32
    %c0_i32_1 = arith.constant 0 : i32
    return %c0_i32, %c0_i32_0 : i32, i32
  }
  func.func @transform_3(%arg0: i32) -> (i32, i32) {
    %c0_i32 = arith.constant 0 : i32
    %c0_i32_0 = arith.constant 0 : i32
    %c0_i32_1 = arith.constant 0 : i32
    return %c0_i32, %c0_i32_0 : i32, i32
  }
  func.func @transform_4(%arg0: i32) -> (i32, i32) {
    %c0_i32 = arith.constant 0 : i32
    %c0_i32_0 = arith.constant 0 : i32
    %c0_i32_1 = arith.constant 0 : i32
    return %c0_i32, %c0_i32_0 : i32, i32
  }
  func.func @transform_5(%arg0: i32) -> (i32, i32) {
    %c0_i32 = arith.constant 0 : i32
    %c0_i32_0 = arith.constant 0 : i32
    return %arg0, %c0_i32 : i32, i32
  }
}

module attributes {stable_mosaic.version = 11 : i64} {
  func.func @_attention_kernel(%arg0: i32, %arg1: memref<1x8x96xbf16, #tpu.memory_space<vmem>>, %arg2: memref<1x8x32xbf16, #tpu.memory_space<vmem>>) attributes {dimension_semantics = [#tpu.dimension_semantics<parallel>], iteration_bounds = array<i64: 2>, scalar_prefetch = 0 : i64, scratch_operands = 0 : i64, tpu.core_type = #tpu.core_type<tc>, window_params = [{transform_indices = @transform_0, window_bounds = array<i64: 1, 8, 96>}, {transform_indices = @transform_1, window_bounds = array<i64: 1, 8, 32>}]} {
    %0 = tpu.iota {dimensions = array<i32: 0>} : vector<8x8xi32>
    %1 = tpu.iota {dimensions = array<i32: 1>} : vector<8x8xi32>
    %2 = arith.cmpi sle, %1, %0 : vector<8x8xi32>
    %c0 = arith.constant 0 : index
    %c0_0 = arith.constant 0 : index
    %c0_1 = arith.constant 0 : index
    %3 = vector.load %arg1[%c0, %c0_0, %c0_1] : memref<1x8x96xbf16, #tpu.memory_space<vmem>>, vector<1x8x8xbf16>
    %4 = vector.shape_cast %3 : vector<1x8x8xbf16> to vector<8x8xbf16>
    %c0_2 = arith.constant 0 : index
    %c0_3 = arith.constant 0 : index
    %c32 = arith.constant 32 : index
    %5 = vector.load %arg1[%c0_2, %c0_3, %c32] : memref<1x8x96xbf16, #tpu.memory_space<vmem>>, vector<1x8x8xbf16>
    %6 = vector.shape_cast %5 : vector<1x8x8xbf16> to vector<8x8xbf16>
    %c0_4 = arith.constant 0 : index
    %c0_5 = arith.constant 0 : index
    %c64 = arith.constant 64 : index
    %7 = vector.load %arg1[%c0_4, %c0_5, %c64] : memref<1x8x96xbf16, #tpu.memory_space<vmem>>, vector<1x8x8xbf16>
    %8 = vector.shape_cast %7 : vector<1x8x8xbf16> to vector<8x8xbf16>
    %cst = arith.constant dense<0.000000e+00> : vector<8x8xf32>
    %9 = tpu.matmul %4, %6, %cst {dimension_numbers = #tpu.dot_dimension_numbers<[1], [1], [0], [0], [0, 0, 1, 0], [], []>} : vector<8x8xbf16>, vector<8x8xbf16>, vector<8x8xf32> -> vector<8x8xf32>
    %cst_6 = arith.constant 0.353553385 : f32
    %10 = vector.broadcast %cst_6 : f32 to vector<8x8xf32>
    %11 = arith.mulf %9, %10 : vector<8x8xf32>
    %cst_7 = arith.constant -1.000000e+30 : f32
    %12 = vector.broadcast %cst_7 : f32 to vector<8x8xf32>
    %13 = arith.select %2, %11, %12 : vector<8x8xi1>, vector<8x8xf32>
    %cst_8 = arith.constant dense<0xFF800000> : vector<8xf32>
    %14 = vector.multi_reduction <maximumf>, %13, %cst_8 [1] : vector<8x8xf32> to vector<8xf32>
    %15 = vector.shape_cast %14 : vector<8xf32> to vector<8x1xf32>
    %16 = vector.broadcast %15 : vector<8x1xf32> to vector<8x8xf32>
    %17 = arith.subf %13, %16 : vector<8x8xf32>
    %18 = math.exp %17 : vector<8x8xf32>
    %cst_9 = arith.constant dense<0.000000e+00> : vector<8xf32>
    %19 = vector.multi_reduction <add>, %18, %cst_9 [1] : vector<8x8xf32> to vector<8xf32>
    %20 = vector.shape_cast %19 : vector<8xf32> to vector<8x1xf32>
    %21 = tpu.reciprocal %20 : vector<8x1xf32> -> vector<8x1xf32>
    %22 = vector.broadcast %21 : vector<8x1xf32> to vector<8x8xf32>
    %23 = arith.mulf %18, %22 : vector<8x8xf32>
    %24 = arith.truncf %23 : vector<8x8xf32> to vector<8x8xbf16>
    %cst_10 = arith.constant dense<0.000000e+00> : vector<8x8xf32>
    %25 = tpu.matmul %24, %8, %cst_10 {dimension_numbers = #tpu.dot_dimension_numbers<[1], [0], [0], [1], [0, 0, 1, 1], [], []>} : vector<8x8xbf16>, vector<8x8xbf16>, vector<8x8xf32> -> vector<8x8xf32>
    %c0_11 = arith.constant 0 : index
    %c0_12 = arith.constant 0 : index
    %c8 = arith.constant 8 : index
    %26 = vector.load %arg1[%c0_11, %c0_12, %c8] : memref<1x8x96xbf16, #tpu.memory_space<vmem>>, vector<1x8x8xbf16>
    %27 = vector.shape_cast %26 : vector<1x8x8xbf16> to vector<8x8xbf16>
    %c0_13 = arith.constant 0 : index
    %c0_14 = arith.constant 0 : index
    %c40 = arith.constant 40 : index
    %28 = vector.load %arg1[%c0_13, %c0_14, %c40] : memref<1x8x96xbf16, #tpu.memory_space<vmem>>, vector<1x8x8xbf16>
    %29 = vector.shape_cast %28 : vector<1x8x8xbf16> to vector<8x8xbf16>
    %c0_15 = arith.constant 0 : index
    %c0_16 = arith.constant 0 : index
    %c72 = arith.constant 72 : index
    %30 = vector.load %arg1[%c0_15, %c0_16, %c72] : memref<1x8x96xbf16, #tpu.memory_space<vmem>>, vector<1x8x8xbf16>
    %31 = vector.shape_cast %30 : vector<1x8x8xbf16> to vector<8x8xbf16>
    %cst_17 = arith.constant dense<0.000000e+00> : vector<8x8xf32>
    %32 = tpu.matmul %27, %29, %cst_17 {dimension_numbers = #tpu.dot_dimension_numbers<[1], [1], [0], [0], [0, 0, 1, 0], [], []>} : vector<8x8xbf16>, vector<8x8xbf16>, vector<8x8xf32> -> vector<8x8xf32>
    %cst_18 = arith.constant 0.353553385 : f32
    %33 = vector.broadcast %cst_18 : f32 to vector<8x8xf32>
    %34 = arith.mulf %32, %33 : vector<8x8xf32>
    %cst_19 = arith.constant -1.000000e+30 : f32
    %35 = vector.broadcast %cst_19 : f32 to vector<8x8xf32>
    %36 = arith.select %2, %34, %35 : vector<8x8xi1>, vector<8x8xf32>
    %cst_20 = arith.constant dense<0xFF800000> : vector<8xf32>
    %37 = vector.multi_reduction <maximumf>, %36, %cst_20 [1] : vector<8x8xf32> to vector<8xf32>
    %38 = vector.shape_cast %37 : vector<8xf32> to vector<8x1xf32>
    %39 = vector.broadcast %38 : vector<8x1xf32> to vector<8x8xf32>
    %40 = arith.subf %36, %39 : vector<8x8xf32>
    %41 = math.exp %40 : vector<8x8xf32>
    %cst_21 = arith.constant dense<0.000000e+00> : vector<8xf32>
    %42 = vector.multi_reduction <add>, %41, %cst_21 [1] : vector<8x8xf32> to vector<8xf32>
    %43 = vector.shape_cast %42 : vector<8xf32> to vector<8x1xf32>
    %44 = tpu.reciprocal %43 : vector<8x1xf32> -> vector<8x1xf32>
    %45 = vector.broadcast %44 : vector<8x1xf32> to vector<8x8xf32>
    %46 = arith.mulf %41, %45 : vector<8x8xf32>
    %47 = arith.truncf %46 : vector<8x8xf32> to vector<8x8xbf16>
    %cst_22 = arith.constant dense<0.000000e+00> : vector<8x8xf32>
    %48 = tpu.matmul %47, %31, %cst_22 {dimension_numbers = #tpu.dot_dimension_numbers<[1], [0], [0], [1], [0, 0, 1, 1], [], []>} : vector<8x8xbf16>, vector<8x8xbf16>, vector<8x8xf32> -> vector<8x8xf32>
    %c0_23 = arith.constant 0 : index
    %c0_24 = arith.constant 0 : index
    %c16 = arith.constant 16 : index
    %49 = vector.load %arg1[%c0_23, %c0_24, %c16] : memref<1x8x96xbf16, #tpu.memory_space<vmem>>, vector<1x8x8xbf16>
    %50 = vector.shape_cast %49 : vector<1x8x8xbf16> to vector<8x8xbf16>
    %c0_25 = arith.constant 0 : index
    %c0_26 = arith.constant 0 : index
    %c48 = arith.constant 48 : index
    %51 = vector.load %arg1[%c0_25, %c0_26, %c48] : memref<1x8x96xbf16, #tpu.memory_space<vmem>>, vector<1x8x8xbf16>
    %52 = vector.shape_cast %51 : vector<1x8x8xbf16> to vector<8x8xbf16>
    %c0_27 = arith.constant 0 : index
    %c0_28 = arith.constant 0 : index
    %c80 = arith.constant 80 : index
    %53 = vector.load %arg1[%c0_27, %c0_28, %c80] : memref<1x8x96xbf16, #tpu.memory_space<vmem>>, vector<1x8x8xbf16>
    %54 = vector.shape_cast %53 : vector<1x8x8xbf16> to vector<8x8xbf16>
    %cst_29 = arith.constant dense<0.000000e+00> : vector<8x8xf32>
    %55 = tpu.matmul %50, %52, %cst_29 {dimension_numbers = #tpu.dot_dimension_numbers<[1], [1], [0], [0], [0, 0, 1, 0], [], []>} : vector<8x8xbf16>, vector<8x8xbf16>, vector<8x8xf32> -> vector<8x8xf32>
    %cst_30 = arith.constant 0.353553385 : f32
    %56 = vector.broadcast %cst_30 : f32 to vector<8x8xf32>
    %57 = arith.mulf %55, %56 : vector<8x8xf32>
    %cst_31 = arith.constant -1.000000e+30 : f32
    %58 = vector.broadcast %cst_31 : f32 to vector<8x8xf32>
    %59 = arith.select %2, %57, %58 : vector<8x8xi1>, vector<8x8xf32>
    %cst_32 = arith.constant dense<0xFF800000> : vector<8xf32>
    %60 = vector.multi_reduction <maximumf>, %59, %cst_32 [1] : vector<8x8xf32> to vector<8xf32>
    %61 = vector.shape_cast %60 : vector<8xf32> to vector<8x1xf32>
    %62 = vector.broadcast %61 : vector<8x1xf32> to vector<8x8xf32>
    %63 = arith.subf %59, %62 : vector<8x8xf32>
    %64 = math.exp %63 : vector<8x8xf32>
    %cst_33 = arith.constant dense<0.000000e+00> : vector<8xf32>
    %65 = vector.multi_reduction <add>, %64, %cst_33 [1] : vector<8x8xf32> to vector<8xf32>
    %66 = vector.shape_cast %65 : vector<8xf32> to vector<8x1xf32>
    %67 = tpu.reciprocal %66 : vector<8x1xf32> -> vector<8x1xf32>
    %68 = vector.broadcast %67 : vector<8x1xf32> to vector<8x8xf32>
    %69 = arith.mulf %64, %68 : vector<8x8xf32>
    %70 = arith.truncf %69 : vector<8x8xf32> to vector<8x8xbf16>
    %cst_34 = arith.constant dense<0.000000e+00> : vector<8x8xf32>
    %71 = tpu.matmul %70, %54, %cst_34 {dimension_numbers = #tpu.dot_dimension_numbers<[1], [0], [0], [1], [0, 0, 1, 1], [], []>} : vector<8x8xbf16>, vector<8x8xbf16>, vector<8x8xf32> -> vector<8x8xf32>
    %c0_35 = arith.constant 0 : index
    %c0_36 = arith.constant 0 : index
    %c24 = arith.constant 24 : index
    %72 = vector.load %arg1[%c0_35, %c0_36, %c24] : memref<1x8x96xbf16, #tpu.memory_space<vmem>>, vector<1x8x8xbf16>
    %73 = vector.shape_cast %72 : vector<1x8x8xbf16> to vector<8x8xbf16>
    %c0_37 = arith.constant 0 : index
    %c0_38 = arith.constant 0 : index
    %c56 = arith.constant 56 : index
    %74 = vector.load %arg1[%c0_37, %c0_38, %c56] : memref<1x8x96xbf16, #tpu.memory_space<vmem>>, vector<1x8x8xbf16>
    %75 = vector.shape_cast %74 : vector<1x8x8xbf16> to vector<8x8xbf16>
    %c0_39 = arith.constant 0 : index
    %c0_40 = arith.constant 0 : index
    %c88 = arith.constant 88 : index
    %76 = vector.load %arg1[%c0_39, %c0_40, %c88] : memref<1x8x96xbf16, #tpu.memory_space<vmem>>, vector<1x8x8xbf16>
    %77 = vector.shape_cast %76 : vector<1x8x8xbf16> to vector<8x8xbf16>
    %cst_41 = arith.constant dense<0.000000e+00> : vector<8x8xf32>
    %78 = tpu.matmul %73, %75, %cst_41 {dimension_numbers = #tpu.dot_dimension_numbers<[1], [1], [0], [0], [0, 0, 1, 0], [], []>} : vector<8x8xbf16>, vector<8x8xbf16>, vector<8x8xf32> -> vector<8x8xf32>
    %cst_42 = arith.constant 0.353553385 : f32
    %79 = vector.broadcast %cst_42 : f32 to vector<8x8xf32>
    %80 = arith.mulf %78, %79 : vector<8x8xf32>
    %cst_43 = arith.constant -1.000000e+30 : f32
    %81 = vector.broadcast %cst_43 : f32 to vector<8x8xf32>
    %82 = arith.select %2, %80, %81 : vector<8x8xi1>, vector<8x8xf32>
    %cst_44 = arith.constant dense<0xFF800000> : vector<8xf32>
    %83 = vector.multi_reduction <maximumf>, %82, %cst_44 [1] : vector<8x8xf32> to vector<8xf32>
    %84 = vector.shape_cast %83 : vector<8xf32> to vector<8x1xf32>
    %85 = vector.broadcast %84 : vector<8x1xf32> to vector<8x8xf32>
    %86 = arith.subf %82, %85 : vector<8x8xf32>
    %87 = math.exp %86 : vector<8x8xf32>
    %cst_45 = arith.constant dense<0.000000e+00> : vector<8xf32>
    %88 = vector.multi_reduction <add>, %87, %cst_45 [1] : vector<8x8xf32> to vector<8xf32>
    %89 = vector.shape_cast %88 : vector<8xf32> to vector<8x1xf32>
    %90 = tpu.reciprocal %89 : vector<8x1xf32> -> vector<8x1xf32>
    %91 = vector.broadcast %90 : vector<8x1xf32> to vector<8x8xf32>
    %92 = arith.mulf %87, %91 : vector<8x8xf32>
    %93 = arith.truncf %92 : vector<8x8xf32> to vector<8x8xbf16>
    %cst_46 = arith.constant dense<0.000000e+00> : vector<8x8xf32>
    %94 = tpu.matmul %93, %77, %cst_46 {dimension_numbers = #tpu.dot_dimension_numbers<[1], [0], [0], [1], [0, 0, 1, 1], [], []>} : vector<8x8xbf16>, vector<8x8xbf16>, vector<8x8xf32> -> vector<8x8xf32>
    %95 = tpu.concatenate %25, %48, %71, %94 in 1 : vector<8x8xf32>, vector<8x8xf32>, vector<8x8xf32>, vector<8x8xf32> -> vector<8x32xf32>
    %96 = arith.truncf %95 : vector<8x32xf32> to vector<8x32xbf16>
    %c0_47 = arith.constant 0 : index
    %c0_48 = arith.constant 0 : index
    %c0_49 = arith.constant 0 : index
    %97 = vector.load %arg2[%c0_47, %c0_48, %c0_49] : memref<1x8x32xbf16, #tpu.memory_space<vmem>>, vector<1x8x32xbf16>
    %98 = vector.shape_cast %97 : vector<1x8x32xbf16> to vector<8x32xbf16>
    %99 = vector.shape_cast %96 : vector<8x32xbf16> to vector<1x8x32xbf16>
    tpu.vector_store %arg2[%c0_47, %c0_48, %c0_49], %99 {strides = array<i32>} : memref<1x8x32xbf16, #tpu.memory_space<vmem>>, vector<1x8x32xbf16>,
    return
  }
  func.func @transform_0(%arg0: i32) -> (i32, i32, i32) {
    %c0_i32 = arith.constant 0 : i32
    %c0_i32_0 = arith.constant 0 : i32
    %c0_i32_1 = arith.constant 0 : i32
    return %arg0, %c0_i32, %c0_i32_0 : i32, i32, i32
  }
  func.func @transform_1(%arg0: i32) -> (i32, i32, i32) {
    %c0_i32 = arith.constant 0 : i32
    %c0_i32_0 = arith.constant 0 : i32
    %c0_i32_1 = arith.constant 0 : i32
    return %arg0, %c0_i32, %c0_i32_0 : i32, i32, i32
  }
}

module attributes {stable_mosaic.version = 11 : i64} {
  func.func @_layernorm_kernel(%arg0: i32, %arg1: memref<16x32xbf16, #tpu.memory_space<vmem>>, %arg2: memref<1x32xbf16, #tpu.memory_space<vmem>>, %arg3: memref<1x32xbf16, #tpu.memory_space<vmem>>, %arg4: memref<16x32xbf16, #tpu.memory_space<vmem>>) attributes {dimension_semantics = [#tpu.dimension_semantics<parallel>], iteration_bounds = array<i64: 1>, scalar_prefetch = 0 : i64, scratch_operands = 0 : i64, tpu.core_type = #tpu.core_type<tc>, window_params = [{transform_indices = @transform_0, window_bounds = array<i64: 16, 32>}, {pipeline_mode = #tpu.pipeline_mode<synchronous>, transform_indices = @transform_1, window_bounds = array<i64: 1, 32>}, {pipeline_mode = #tpu.pipeline_mode<synchronous>, transform_indices = @transform_2, window_bounds = array<i64: 1, 32>}, {transform_indices = @transform_3, window_bounds = array<i64: 16, 32>}]} {
    %c0 = arith.constant 0 : index
    %c0_0 = arith.constant 0 : index
    %0 = vector.load %arg1[%c0, %c0_0] : memref<16x32xbf16, #tpu.memory_space<vmem>>, vector<16x32xbf16>
    %1 = arith.extf %0 : vector<16x32xbf16> to vector<16x32xf32>
    %cst = arith.constant dense<0.000000e+00> : vector<16xf32>
    %2 = vector.multi_reduction <add>, %1, %cst [1] : vector<16x32xf32> to vector<16xf32>
    %3 = vector.shape_cast %2 : vector<16xf32> to vector<16x1xf32>
    %cst_1 = arith.constant 3.200000e+01 : f32
    %4 = vector.broadcast %cst_1 : f32 to vector<16x1xf32>
    %5 = arith.divf %3, %4 : vector<16x1xf32>
    %6 = vector.broadcast %5 : vector<16x1xf32> to vector<16x32xf32>
    %7 = arith.subf %1, %6 : vector<16x32xf32>
    %8 = arith.mulf %7, %7 : vector<16x32xf32>
    %cst_2 = arith.constant dense<0.000000e+00> : vector<16xf32>
    %9 = vector.multi_reduction <add>, %8, %cst_2 [1] : vector<16x32xf32> to vector<16xf32>
    %10 = vector.shape_cast %9 : vector<16xf32> to vector<16x1xf32>
    %cst_3 = arith.constant 3.200000e+01 : f32
    %11 = vector.broadcast %cst_3 : f32 to vector<16x1xf32>
    %12 = arith.divf %10, %11 : vector<16x1xf32>
    %cst_4 = arith.constant 9.99999974E-6 : f32
    %13 = vector.broadcast %cst_4 : f32 to vector<16x1xf32>
    %14 = arith.addf %12, %13 : vector<16x1xf32>
    %15 = math.rsqrt %14 : vector<16x1xf32>
    %16 = vector.broadcast %15 : vector<16x1xf32> to vector<16x32xf32>
    %17 = arith.mulf %7, %16 : vector<16x32xf32>
    %c0_5 = arith.constant 0 : index
    %c0_6 = arith.constant 0 : index
    %18 = vector.load %arg2[%c0_5, %c0_6] : memref<1x32xbf16, #tpu.memory_space<vmem>>, vector<1x32xbf16>
    %19 = arith.extf %18 : vector<1x32xbf16> to vector<1x32xf32>
    %20 = vector.broadcast %19 : vector<1x32xf32> to vector<16x32xf32>
    %21 = arith.mulf %17, %20 : vector<16x32xf32>
    %c0_7 = arith.constant 0 : index
    %c0_8 = arith.constant 0 : index
    %22 = vector.load %arg3[%c0_7, %c0_8] : memref<1x32xbf16, #tpu.memory_space<vmem>>, vector<1x32xbf16>
    %23 = arith.extf %22 : vector<1x32xbf16> to vector<1x32xf32>
    %24 = vector.broadcast %23 : vector<1x32xf32> to vector<16x32xf32>
    %25 = arith.addf %21, %24 : vector<16x32xf32>
    %26 = arith.truncf %25 : vector<16x32xf32> to vector<16x32xbf16>
    %c0_9 = arith.constant 0 : index
    %c0_10 = arith.constant 0 : index
    %27 = vector.load %arg4[%c0_9, %c0_10] : memref<16x32xbf16, #tpu.memory_space<vmem>>, vector<16x32xbf16>
    tpu.vector_store %arg4[%c0_9, %c0_10], %26 {strides = array<i32>} : memref<16x32xbf16, #tpu.memory_space<vmem>>, vector<16x32xbf16>,
    return
  }
  func.func @transform_0(%arg0: i32) -> (i32, i32) {
    %c0_i32 = arith.constant 0 : i32
    %c0_i32_0 = arith.constant 0 : i32
    return %arg0, %c0_i32 : i32, i32
  }
  func.func @transform_1(%arg0: i32) -> (i32, i32) {
    %c0_i32 = arith.constant 0 : i32
    %c0_i32_0 = arith.constant 0 : i32
    %c0_i32_1 = arith.constant 0 : i32
    return %c0_i32, %c0_i32_0 : i32, i32
  }
  func.func @transform_2(%arg0: i32) -> (i32, i32) {
    %c0_i32 = arith.constant 0 : i32
    %c0_i32_0 = arith.constant 0 : i32
    %c0_i32_1 = arith.constant 0 : i32
    return %c0_i32, %c0_i32_0 : i32, i32
  }
  func.func @transform_3(%arg0: i32) -> (i32, i32) {
    %c0_i32 = arith.constant 0 : i32
    %c0_i32_0 = arith.constant 0 : i32
    return %arg0, %c0_i32 : i32, i32
  }
}

module attributes {stable_mosaic.version = 11 : i64} {
  func.func @_fused_linear_kernel(%arg0: i32, %arg1: memref<16x128xbf16, #tpu.memory_space<vmem>>, %arg2: memref<128x32xbf16, #tpu.memory_space<vmem>>, %arg3: memref<1x32xbf16, #tpu.memory_space<vmem>>, %arg4: memref<16x32xbf16, #tpu.memory_space<vmem>>, %arg5: memref<16x32xbf16, #tpu.memory_space<vmem>>) attributes {dimension_semantics = [#tpu.dimension_semantics<parallel>], iteration_bounds = array<i64: 1>, scalar_prefetch = 0 : i64, scratch_operands = 0 : i64, tpu.core_type = #tpu.core_type<tc>, window_params = [{transform_indices = @transform_0, window_bounds = array<i64: 16, 128>}, {pipeline_mode = #tpu.pipeline_mode<synchronous>, transform_indices = @transform_1, window_bounds = array<i64: 128, 32>}, {pipeline_mode = #tpu.pipeline_mode<synchronous>, transform_indices = @transform_2, window_bounds = array<i64: 1, 32>}, {transform_indices = @transform_3, window_bounds = array<i64: 16, 32>}, {transform_indices = @transform_4, window_bounds = array<i64: 16, 32>}]} {
    %c0 = arith.constant 0 : index
    %c0_0 = arith.constant 0 : index
    %0 = vector.load %arg1[%c0, %c0_0] : memref<16x128xbf16, #tpu.memory_space<vmem>>, vector<16x128xbf16>
    %c0_1 = arith.constant 0 : index
    %c0_2 = arith.constant 0 : index
    %1 = vector.load %arg2[%c0_1, %c0_2] : memref<128x32xbf16, #tpu.memory_space<vmem>>, vector<128x32xbf16>
    %cst = arith.constant dense<0.000000e+00> : vector<16x32xf32>
    %2 = tpu.matmul %0, %1, %cst {dimension_numbers = #tpu.dot_dimension_numbers<[1], [0], [0], [1], [0, 0, 1, 1], [], []>} : vector<16x128xbf16>, vector<128x32xbf16>, vector<16x32xf32> -> vector<16x32xf32>
    %c0_3 = arith.constant 0 : index
    %c0_4 = arith.constant 0 : index
    %3 = vector.load %arg3[%c0_3, %c0_4] : memref<1x32xbf16, #tpu.memory_space<vmem>>, vector<1x32xbf16>
    %4 = arith.extf %3 : vector<1x32xbf16> to vector<1x32xf32>
    %5 = vector.broadcast %4 : vector<1x32xf32> to vector<16x32xf32>
    %6 = arith.addf %2, %5 : vector<16x32xf32>
    %c0_5 = arith.constant 0 : index
    %c0_6 = arith.constant 0 : index
    %7 = vector.load %arg4[%c0_5, %c0_6] : memref<16x32xbf16, #tpu.memory_space<vmem>>, vector<16x32xbf16>
    %8 = arith.extf %7 : vector<16x32xbf16> to vector<16x32xf32>
    %9 = arith.addf %6, %8 : vector<16x32xf32>
    %10 = arith.truncf %9 : vector<16x32xf32> to vector<16x32xbf16>
    %c0_7 = arith.constant 0 : index
    %c0_8 = arith.constant 0 : index
    %11 = vector.load %arg5[%c0_7, %c0_8] : memref<16x32xbf16, #tpu.memory_space<vmem>>, vector<16x32xbf16>
    tpu.vector_store %arg5[%c0_7, %c0_8], %10 {strides = array<i32>} : memref<16x32xbf16, #tpu.memory_space<vmem>>, vector<16x32xbf16>,
    return
  }
  func.func @transform_0(%arg0: i32) -> (i32, i32) {
    %c0_i32 = arith.constant 0 : i32
    %c0_i32_0 = arith.constant 0 : i32
    return %arg0, %c0_i32 : i32, i32
  }
  func.func @transform_1(%arg0: i32) -> (i32, i32) {
    %c0_i32 = arith.constant 0 : i32
    %c0_i32_0 = arith.constant 0 : i32
    %c0_i32_1 = arith.constant 0 : i32
    return %c0_i32, %c0_i32_0 : i32, i32
  }
  func.func @transform_2(%arg0: i32) -> (i32, i32) {
    %c0_i32 = arith.constant 0 : i32
    %c0_i32_0 = arith.constant 0 : i32
    %c0_i32_1 = arith.constant 0 : i32
    return %c0_i32, %c0_i32_0 : i32, i32
  }
  func.func @transform_3(%arg0: i32) -> (i32, i32) {
    %c0_i32 = arith.constant 0 : i32
    %c0_i32_0 = arith.constant 0 : i32
    return %arg0, %c0_i32 : i32, i32
  }
  func.func @transform_4(%arg0: i32) -> (i32, i32) {
    %c0_i32 = arith.constant 0 : i32
    %c0_i32_0 = arith.constant 0 : i32
    return %arg0, %c0_i32 : i32, i32
  }
}

module attributes {stable_mosaic.version = 11 : i64} {
  func.func @_lm_head_kernel(%arg0: i32, %arg1: i32, %arg2: memref<16x32xbf16, #tpu.memory_space<vmem>>, %arg3: memref<32x128xbf16, #tpu.memory_space<vmem>>, %arg4: memref<16x128xf32, #tpu.memory_space<vmem>>) attributes {dimension_semantics = [#tpu.dimension_semantics<parallel>, #tpu.dimension_semantics<parallel>], iteration_bounds = array<i64: 1, 1>, scalar_prefetch = 0 : i64, scratch_operands = 0 : i64, tpu.core_type = #tpu.core_type<tc>, window_params = [{transform_indices = @transform_0, window_bounds = array<i64: 16, 32>}, {transform_indices = @transform_1, window_bounds = array<i64: 32, 128>}, {transform_indices = @transform_2, window_bounds = array<i64: 16, 128>}]} {
    %c0 = arith.constant 0 : index
    %c0_0 = arith.constant 0 : index
    %0 = vector.load %arg2[%c0, %c0_0] : memref<16x32xbf16, #tpu.memory_space<vmem>>, vector<16x32xbf16>
    %c0_1 = arith.constant 0 : index
    %c0_2 = arith.constant 0 : index
    %1 = vector.load %arg3[%c0_1, %c0_2] : memref<32x128xbf16, #tpu.memory_space<vmem>>, vector<32x128xbf16>
    %cst = arith.constant dense<0.000000e+00> : vector<16x128xf32>
    %2 = tpu.matmul %0, %1, %cst {dimension_numbers = #tpu.dot_dimension_numbers<[1], [0], [0], [1], [0, 0, 1, 1], [], []>} : vector<16x32xbf16>, vector<32x128xbf16>, vector<16x128xf32> -> vector<16x128xf32>
    %c0_3 = arith.constant 0 : index
    %c0_4 = arith.constant 0 : index
    %3 = vector.load %arg4[%c0_3, %c0_4] : memref<16x128xf32, #tpu.memory_space<vmem>>, vector<16x128xf32>
    tpu.vector_store %arg4[%c0_3, %c0_4], %2 {strides = array<i32>} : memref<16x128xf32, #tpu.memory_space<vmem>>, vector<16x128xf32>,
    return
  }
  func.func @transform_0(%arg0: i32, %arg1: i32) -> (i32, i32) {
    %c0_i32 = arith.constant 0 : i32
    %c0_i32_0 = arith.constant 0 : i32
    return %arg1, %c0_i32 : i32, i32
  }
  func.func @transform_1(%arg0: i32, %arg1: i32) -> (i32, i32) {
    %c0_i32 = arith.constant 0 : i32
    %c0_i32_0 = arith.constant 0 : i32
    return %c0_i32, %arg0 : i32, i32
  }
  func.func @transform_2(%arg0: i32, %arg1: i32) -> (i32, i32) {
    %c0_i32 = arith.constant 0 : i32
    return %arg1, %arg0 : i32, i32
  }
}

</mosaic_0001>

<llo_original>
// kernel: gpt_forward.14
$region0: #{gpt_forward.14}
  #allocation0 [shape = 'u32[]', space=smem, size = 0x4, offset = 0x4, fixed_abs, tag = 'smem constant byte address 0x4 - core index']
  #allocation1 [shape = 'u32[72,128]{1,0:T(1,128)}', space=vmem, size = 0x9000, scoped, tag = 'internal scratch']
  %s0 = inlined_call_operand.vmem [shape: bf16[16,32], index: 0, kind: input, shape index: {}]
  %s1 = inlined_call_operand.vmem [shape: bf16[32,32], index: 1, kind: input, shape index: {}]
  %s2 = inlined_call_operand.vmem [shape: bf16[1,32], index: 2, kind: input, shape index: {}]
  %s3 = inlined_call_operand.vmem [shape: bf16[16,32], index: 3, kind: input, shape index: {}]
  %s4 = inlined_call_operand.vmem [shape: bf16[16,32], index: 4, kind: output, shape index: {}]
  %s5 = sld [smem:[#allocation0]]
  $region26: #{gpt_forward.14} parent=0
    _
  %s7 = ssub.s32 1, %s5
  %s8 = scalar_select 0, %s7, %s5
  // Predicated region
  $region2: #{gpt_forward.14} parent=0 // pred_check
    _
  $region3: #{gpt_forward.14} parent=0 // pred_check_branch
    %10 = sbr.rel (0) target = $region5
  $region4: #{gpt_forward.14} parent=0 // pred_region
    _
  $region5: #{gpt_forward.14} parent=0 // pred_fallthru
    _
  // Predicated region
  $region6: #{gpt_forward.14} parent=0 // pred_check
    _
  $region7: #{gpt_forward.14} parent=0 // pred_check_branch
    %12 = sbr.rel (0) target = $region9
  $region8: #{gpt_forward.14} parent=0 // pred_region
    _
  $region9: #{gpt_forward.14} parent=0 // pred_fallthru
    _
  // Predicated region
  $region10: #{gpt_forward.14} parent=0 // pred_check
    _
  $region11: #{gpt_forward.14} parent=0 // pred_check_branch
    %14 = sbr.rel (0) target = $region13
  $region12: #{gpt_forward.14} parent=0 // pred_region
    _
  $region13: #{gpt_forward.14} parent=0 // pred_fallthru
    _
  // Predicated region
  $region14: #{gpt_forward.14} parent=0 // pred_check
    _
  $region15: #{gpt_forward.14} parent=0 // pred_check_branch
    %16 = sbr.rel (0) target = $region17
  $region16: #{gpt_forward.14} parent=0 // pred_region
    _
  $region17: #{gpt_forward.14} parent=0 // pred_fallthru
    _
  %v18 = vld [vmem:[%s0] sm:$0xf]
  %v19 = vld [vmem:[%s0 + $0x4] sm:$0xf]
  %v20 = vld [vmem:[%s1] sm:$0xf]
  %v21 = vld [vmem:[%s1 + $0x4] sm:$0xf]
  %v22 = vld [vmem:[%s1 + $0x8] sm:$0xf]
  %v23 = vld [vmem:[%s1 + $0xc] sm:$0xf]
  %v24 = vld [vmem:[%s2] sm:$0x1]
  %v25 = vunpack.c.l.bf16 %v24
  %v26 = vperm.slane %v25, 0
  %v29 = vunpack.c.l.b16 %v18
  %v30 = vunpack.c.l.b16 %v19
  %v31 = vpack.c.b16 %v30, %v29
  %v36 = vunpack.c.l.b16 %v20
  %v37 = vunpack.c.l.b16 %v21
  %v38 = vunpack.c.l.b16 %v22
  %v39 = vunpack.c.l.b16 %v23
  %v40 = vpack.c.b16 %v37, %v36
  %v41 = vpack.c.b16 %v39, %v38
  %vm44 = vcmask 261120
  %v46 = vsel %vm44, %v31, 0
  %48 = vmatpush.bf16.msra.mxu0 0
  %49 = vmatpush.bf16.msra.mxu0 0
  %50 = vmatpush.bf16.msra.mxu0 0
  %51 = vmatpush.bf16.msra.mxu0 0
  %52 = vmatpush.bf16.msra.mxu0 0
  %53 = vmatpush.bf16.msra.mxu0 0
  %54 = vmatpush.bf16.msra.mxu0 %v41
  %55 = vmatpush.bf16.msra.mxu0 %v40
  %56 = vmatmul.bf16.gmra.mxu0 %v46
  %v57 = vpop.f32.mrf.mxu0
  %v58 = vadd.f32 %v26, %v57
  %v59 = vpop.f32.mrf.mxu0
  %v60 = vadd.f32 %v26, %v59
  %61 = vdwg.mxu0
  %v62 = vld [vmem:[%s3] sm:$0xf]
  %v63 = vld [vmem:[%s3 + $0x4] sm:$0xf]
  %v64 = vunpack.c.l.bf16 %v62
  %v65 = vunpack.c.l.bf16 %v63
  %v66 = vadd.f32 %v58, %v64
  %v67 = vadd.f32 %v60, %v65
  %v68 = vpack.c.bf16 %v66, %v66
  %v69 = vpack.c.bf16 %v67, %v67
  %vm70 = vcmask 257024
  %71 = vst.msk [vmem:[%s4] sm:$0xf] %vm70, %v68
  %72 = vst.msk [vmem:[%s4 + $0x4] sm:$0xf] %vm70, %v69
  // Predicated region
  $region18: #{gpt_forward.14} parent=0 // pred_check
    _
  $region19: #{gpt_forward.14} parent=0 // pred_check_branch
    %74 = sbr.rel (0) target = $region21
  $region20: #{gpt_forward.14} parent=0 // pred_region
    _
  $region21: #{gpt_forward.14} parent=0 // pred_fallthru
    _
  // Predicated region
  $region22: #{gpt_forward.14} parent=0 // pred_check
    _
  $region23: #{gpt_forward.14} parent=0 // pred_check_branch
    %76 = sbr.rel (0) target = $region25
  $region24: #{gpt_forward.14} parent=0 // pred_region
    _
  $region25: #{gpt_forward.14} parent=0 // pred_fallthru
    _

// kernel: gpt_forward.12
$region0: #{gpt_forward.12}
  #allocation0 [shape = 'u32[]', space=smem, size = 0x4, offset = 0x4, fixed_abs, tag = 'smem constant byte address 0x4 - core index']
  #allocation1 [shape = 'u32[72,128]{1,0:T(1,128)}', space=vmem, size = 0x9000, scoped, tag = 'internal scratch']
  %s0 = inlined_call_operand.vmem [shape: bf16[16,32], index: 0, kind: input, shape index: {}]
  %s1 = inlined_call_operand.vmem [shape: bf16[1,32], index: 1, kind: input, shape index: {}]
  %s2 = inlined_call_operand.vmem [shape: bf16[1,32], index: 2, kind: input, shape index: {}]
  %s3 = inlined_call_operand.vmem [shape: bf16[32,96], index: 3, kind: input, shape index: {}]
  %s4 = inlined_call_operand.vmem [shape: bf16[1,96], index: 4, kind: input, shape index: {}]
  %s5 = inlined_call_operand.vmem [shape: bf16[16,96], index: 5, kind: output, shape index: {}]
  %s6 = sld [smem:[#allocation0]]
  $region30: #{gpt_forward.12} parent=0
    _
  %s8 = ssub.s32 1, %s6
  %s9 = scalar_select 0, %s8, %s6
  // Predicated region
  $region2: #{gpt_forward.12} parent=0 // pred_check
    _
  $region3: #{gpt_forward.12} parent=0 // pred_check_branch
    %11 = sbr.rel (0) target = $region5
  $region4: #{gpt_forward.12} parent=0 // pred_region
    _
  $region5: #{gpt_forward.12} parent=0 // pred_fallthru
    _
  // Predicated region
  $region6: #{gpt_forward.12} parent=0 // pred_check
    _
  $region7: #{gpt_forward.12} parent=0 // pred_check_branch
    %13 = sbr.rel (0) target = $region9
  $region8: #{gpt_forward.12} parent=0 // pred_region
    _
  $region9: #{gpt_forward.12} parent=0 // pred_fallthru
    _
  // Predicated region
  $region10: #{gpt_forward.12} parent=0 // pred_check
    _
  $region11: #{gpt_forward.12} parent=0 // pred_check_branch
    %15 = sbr.rel (0) target = $region13
  $region12: #{gpt_forward.12} parent=0 // pred_region
    _
  $region13: #{gpt_forward.12} parent=0 // pred_fallthru
    _
  // Predicated region
  $region14: #{gpt_forward.12} parent=0 // pred_check
    _
  $region15: #{gpt_forward.12} parent=0 // pred_check_branch
    %17 = sbr.rel (0) target = $region17
  $region16: #{gpt_forward.12} parent=0 // pred_region
    _
  $region17: #{gpt_forward.12} parent=0 // pred_fallthru
    _
  // Predicated region
  $region18: #{gpt_forward.12} parent=0 // pred_check
    _
  $region19: #{gpt_forward.12} parent=0 // pred_check_branch
    %19 = sbr.rel (0) target = $region21
  $region20: #{gpt_forward.12} parent=0 // pred_region
    _
  $region21: #{gpt_forward.12} parent=0 // pred_fallthru
    _
  %v21 = vld [vmem:[%s0] sm:$0xf]
  %v22 = vld [vmem:[%s0 + $0x4] sm:$0xf]
  %v23 = vunpack.c.l.bf16 %v21
  %v24 = vunpack.c.l.bf16 %v22
  %vm25 = vcmask 261120
  %v26 = vsel %vm25, %v23, 0.0
  %27 = vadd.xlane.f32.xlu0 %v26
  %v28 = vpop.xlane.xlu0 %27
  %v29 = vsel %vm25, %v24, 0.0
  %30 = vadd.xlane.f32.xlu0 %v29
  %v31 = vpop.xlane.xlu0 %30
  %v32 = vrcp.pop 32.0
  %v33 = vmul.f32 32.0, %v32
  %v34 = vsub.f32 1.0, %v33
  %v35 = vmul.f32 %v32, %v34
  %v36 = vadd.f32 %v32, %v35
  %vm37 = vweird.f32 %v32
  %v38 = vsel %vm37, %v32, %v36
  %v39 = vmul.f32 %v28, %v38
  %v40 = vmul.f32 %v31, %v38
  %v41 = vsub.f32 %v23, %v39
  %v42 = vsub.f32 %v24, %v40
  %v43 = vmul.f32 %v41, %v41
  %v44 = vmul.f32 %v42, %v42
  %v45 = vsel %vm25, %v43, 0.0
  %46 = vadd.xlane.f32.xlu0 %v45
  %v47 = vpop.xlane.xlu0 %46
  %v48 = vsel %vm25, %v44, 0.0
  %49 = vadd.xlane.f32.xlu0 %v48
  %v50 = vpop.xlane.xlu0 %49
  %v51 = vmul.f32 %v47, %v38
  %v52 = vmul.f32 %v50, %v38
  %v53 = vadd.f32 %v51, 1e-05
  %v54 = vadd.f32 %v52, 1e-05
  %v55 = vrsqrt.pop %v53
  %v56 = vmul.f32 %v55, %v53
  %v57 = vmul.f32 %v56, %v55
  %v58 = vmul.f32 0.5, %v57
  %v59 = vsub.f32 1.5, %v58
  %v60 = vmul.f32 %v55, %v59
  %vm61 = vweird.f32 %v53
  %vm62 = vweird.f32 %v55
  %vm63 = vmor %vm61, %vm62
  %v64 = vsel %vm63, %v55, %v60
  %v65 = vrsqrt.pop %v54
  %v66 = vmul.f32 %v65, %v54
  %v67 = vmul.f32 %v66, %v65
  %v68 = vmul.f32 0.5, %v67
  %v69 = vsub.f32 1.5, %v68
  %v70 = vmul.f32 %v65, %v69
  %vm71 = vweird.f32 %v54
  %vm72 = vweird.f32 %v65
  %vm73 = vmor %vm71, %vm72
  %v74 = vsel %vm73, %v65, %v70
  %v75 = vmul.f32 %v41, %v64
  %v76 = vmul.f32 %v42, %v74
  %v77 = vld [vmem:[%s1] sm:$0x1]
  %v78 = vunpack.c.l.bf16 %v77
  %v79 = vperm.slane %v78, 0
  %v80 = vmul.f32 %v75, %v79
  %v81 = vmul.f32 %v76, %v79
  %v82 = vld [vmem:[%s2] sm:$0x1]
  %v83 = vunpack.c.l.bf16 %v82
  %v84 = vperm.slane %v83, 0
  %v85 = vadd.f32 %v80, %v84
  %v86 = vadd.f32 %v81, %v84
  %v87 = vpack.c.bf16 %v86, %v85
  %v88 = vld [vmem:[%s3] sm:$0xf]
  %v89 = vld [vmem:[%s3 + $0x4] sm:$0xf]
  %v90 = vld [vmem:[%s3 + $0x8] sm:$0xf]
  %v91 = vld [vmem:[%s3 + $0xc] sm:$0xf]
  %v92 = vld [vmem:[%s4] sm:$0x1]
  %v93 = vunpack.c.l.bf16 %v92
  %v94 = vperm.slane %v93, 0
  %v99 = vunpack.c.l.b16 %v88
  %v100 = vunpack.c.l.b16 %v89
  %v101 = vunpack.c.l.b16 %v90
  %v102 = vunpack.c.l.b16 %v91
  %v103 = vpack.c.b16 %v100, %v99
  %v104 = vpack.c.b16 %v102, %v101
  %v108 = vsel %vm25, %v87, 0
  %110 = vmatpush.bf16.msra.mxu0 0
  %111 = vmatpush.bf16.msra.mxu0 0
  %112 = vmatpush.bf16.msra.mxu0 0
  %113 = vmatpush.bf16.msra.mxu0 0
  %114 = vmatpush.bf16.msra.mxu0 0
  %115 = vmatpush.bf16.msra.mxu0 0
  %116 = vmatpush.bf16.msra.mxu0 %v104
  %117 = vmatpush.bf16.msra.mxu0 %v103
  %118 = vmatmul.bf16.gmra.mxu0 %v108
  %v119 = vpop.f32.mrf.mxu0
  %v120 = vadd.f32 %v94, %v119
  %v121 = vpop.f32.mrf.mxu0
  %v122 = vadd.f32 %v94, %v121
  %123 = vdwg.mxu0
  %v124 = vpack.c.bf16 %v120, %v120
  %v125 = vpack.c.bf16 %v122, %v122
  %vm126 = vcmask 781312
  %127 = vst.msk [vmem:[%s5] sm:$0xf] %vm126, %v124
  %128 = vst.msk [vmem:[%s5 + $0x4] sm:$0xf] %vm126, %v125
  // Predicated region
  $region22: #{gpt_forward.12} parent=0 // pred_check
    _
  $region23: #{gpt_forward.12} parent=0 // pred_check_branch
    %130 = sbr.rel (0) target = $region25
  $region24: #{gpt_forward.12} parent=0 // pred_region
    _
  $region25: #{gpt_forward.12} parent=0 // pred_fallthru
    _
  // Predicated region
  $region26: #{gpt_forward.12} parent=0 // pred_check
    _
  $region27: #{gpt_forward.12} parent=0 // pred_check_branch
    %132 = sbr.rel (0) target = $region29
  $region28: #{gpt_forward.12} parent=0 // pred_region
    _
  $region29: #{gpt_forward.12} parent=0 // pred_fallthru
    _

// kernel: gpt_forward.15
$region0: #{gpt_forward.15}
  #allocation0 [shape = 'u32[]', space=smem, size = 0x4, offset = 0x4, fixed_abs, tag = 'smem constant byte address 0x4 - core index']
  #allocation1 [shape = 'u32[72,128]{1,0:T(1,128)}', space=vmem, size = 0x9000, scoped, tag = 'internal scratch']
  %s0 = inlined_call_operand.vmem [shape: bf16[16,32], index: 0, kind: input, shape index: {}]
  %s1 = inlined_call_operand.vmem [shape: bf16[1,32], index: 1, kind: input, shape index: {}]
  %s2 = inlined_call_operand.vmem [shape: bf16[1,32], index: 2, kind: input, shape index: {}]
  %s3 = inlined_call_operand.vmem [shape: bf16[32,128], index: 3, kind: input, shape index: {}]
  %s4 = inlined_call_operand.vmem [shape: bf16[1,128], index: 4, kind: input, shape index: {}]
  %s5 = inlined_call_operand.vmem [shape: bf16[16,128], index: 5, kind: output, shape index: {}]
  %s6 = sld [smem:[#allocation0]]
  $region30: #{gpt_forward.15} parent=0
    _
  %s8 = ssub.s32 1, %s6
  %s9 = scalar_select 0, %s8, %s6
  // Predicated region
  $region2: #{gpt_forward.15} parent=0 // pred_check
    _
  $region3: #{gpt_forward.15} parent=0 // pred_check_branch
    %11 = sbr.rel (0) target = $region5
  $region4: #{gpt_forward.15} parent=0 // pred_region
    _
  $region5: #{gpt_forward.15} parent=0 // pred_fallthru
    _
  // Predicated region
  $region6: #{gpt_forward.15} parent=0 // pred_check
    _
  $region7: #{gpt_forward.15} parent=0 // pred_check_branch
    %13 = sbr.rel (0) target = $region9
  $region8: #{gpt_forward.15} parent=0 // pred_region
    _
  $region9: #{gpt_forward.15} parent=0 // pred_fallthru
    _
  // Predicated region
  $region10: #{gpt_forward.15} parent=0 // pred_check
    _
  $region11: #{gpt_forward.15} parent=0 // pred_check_branch
    %15 = sbr.rel (0) target = $region13
  $region12: #{gpt_forward.15} parent=0 // pred_region
    _
  $region13: #{gpt_forward.15} parent=0 // pred_fallthru
    _
  // Predicated region
  $region14: #{gpt_forward.15} parent=0 // pred_check
    _
  $region15: #{gpt_forward.15} parent=0 // pred_check_branch
    %17 = sbr.rel (0) target = $region17
  $region16: #{gpt_forward.15} parent=0 // pred_region
    _
  $region17: #{gpt_forward.15} parent=0 // pred_fallthru
    _
  // Predicated region
  $region18: #{gpt_forward.15} parent=0 // pred_check
    _
  $region19: #{gpt_forward.15} parent=0 // pred_check_branch
    %19 = sbr.rel (0) target = $region21
  $region20: #{gpt_forward.15} parent=0 // pred_region
    _
  $region21: #{gpt_forward.15} parent=0 // pred_fallthru
    _
  %v21 = vld [vmem:[%s0] sm:$0xf]
  %v22 = vld [vmem:[%s0 + $0x4] sm:$0xf]
  %v23 = vunpack.c.l.bf16 %v21
  %v24 = vunpack.c.l.bf16 %v22
  %vm25 = vcmask 261120
  %v26 = vsel %vm25, %v23, 0.0
  %27 = vadd.xlane.f32.xlu0 %v26
  %v28 = vpop.xlane.xlu0 %27
  %v29 = vsel %vm25, %v24, 0.0
  %30 = vadd.xlane.f32.xlu0 %v29
  %v31 = vpop.xlane.xlu0 %30
  %v32 = vrcp.pop 32.0
  %v33 = vmul.f32 32.0, %v32
  %v34 = vsub.f32 1.0, %v33
  %v35 = vmul.f32 %v32, %v34
  %v36 = vadd.f32 %v32, %v35
  %vm37 = vweird.f32 %v32
  %v38 = vsel %vm37, %v32, %v36
  %v39 = vmul.f32 %v28, %v38
  %v40 = vmul.f32 %v31, %v38
  %v41 = vsub.f32 %v23, %v39
  %v42 = vsub.f32 %v24, %v40
  %v43 = vmul.f32 %v41, %v41
  %v44 = vmul.f32 %v42, %v42
  %v45 = vsel %vm25, %v43, 0.0
  %46 = vadd.xlane.f32.xlu0 %v45
  %v47 = vpop.xlane.xlu0 %46
  %v48 = vsel %vm25, %v44, 0.0
  %49 = vadd.xlane.f32.xlu0 %v48
  %v50 = vpop.xlane.xlu0 %49
  %v51 = vmul.f32 %v47, %v38
  %v52 = vmul.f32 %v50, %v38
  %v53 = vadd.f32 %v51, 1e-05
  %v54 = vadd.f32 %v52, 1e-05
  %v55 = vrsqrt.pop %v53
  %v56 = vmul.f32 %v55, %v53
  %v57 = vmul.f32 %v56, %v55
  %v58 = vmul.f32 0.5, %v57
  %v59 = vsub.f32 1.5, %v58
  %v60 = vmul.f32 %v55, %v59
  %vm61 = vweird.f32 %v53
  %vm62 = vweird.f32 %v55
  %vm63 = vmor %vm61, %vm62
  %v64 = vsel %vm63, %v55, %v60
  %v65 = vrsqrt.pop %v54
  %v66 = vmul.f32 %v65, %v54
  %v67 = vmul.f32 %v66, %v65
  %v68 = vmul.f32 0.5, %v67
  %v69 = vsub.f32 1.5, %v68
  %v70 = vmul.f32 %v65, %v69
  %vm71 = vweird.f32 %v54
  %vm72 = vweird.f32 %v65
  %vm73 = vmor %vm71, %vm72
  %v74 = vsel %vm73, %v65, %v70
  %v75 = vmul.f32 %v41, %v64
  %v76 = vmul.f32 %v42, %v74
  %v77 = vld [vmem:[%s1] sm:$0x1]
  %v78 = vunpack.c.l.bf16 %v77
  %v79 = vperm.slane %v78, 0
  %v80 = vmul.f32 %v75, %v79
  %v81 = vmul.f32 %v76, %v79
  %v82 = vld [vmem:[%s2] sm:$0x1]
  %v83 = vunpack.c.l.bf16 %v82
  %v84 = vperm.slane %v83, 0
  %v85 = vadd.f32 %v80, %v84
  %v86 = vadd.f32 %v81, %v84
  %v87 = vpack.c.bf16 %v86, %v85
  %v88 = vld [vmem:[%s3] sm:$0xf]
  %v89 = vld [vmem:[%s3 + $0x4] sm:$0xf]
  %v90 = vld [vmem:[%s3 + $0x8] sm:$0xf]
  %v91 = vld [vmem:[%s3 + $0xc] sm:$0xf]
  %v92 = vld [vmem:[%s4] sm:$0x1]
  %v93 = vunpack.c.l.bf16 %v92
  %v94 = vperm.slane %v93, 0
  %v99 = vunpack.c.l.b16 %v88
  %v100 = vunpack.c.l.b16 %v89
  %v101 = vunpack.c.l.b16 %v90
  %v102 = vunpack.c.l.b16 %v91
  %v103 = vpack.c.b16 %v100, %v99
  %v104 = vpack.c.b16 %v102, %v101
  %v108 = vsel %vm25, %v87, 0
  %110 = vmatpush.bf16.msra.mxu0 0
  %111 = vmatpush.bf16.msra.mxu0 0
  %112 = vmatpush.bf16.msra.mxu0 0
  %113 = vmatpush.bf16.msra.mxu0 0
  %114 = vmatpush.bf16.msra.mxu0 0
  %115 = vmatpush.bf16.msra.mxu0 0
  %116 = vmatpush.bf16.msra.mxu0 %v104
  %117 = vmatpush.bf16.msra.mxu0 %v103
  %118 = vmatmul.bf16.gmra.mxu0 %v108
  %v119 = vpop.f32.mrf.mxu0
  %v120 = vadd.f32 %v94, %v119
  %v121 = vpop.f32.mrf.mxu0
  %v122 = vadd.f32 %v94, %v121
  %123 = vdwg.mxu0
  %v124 = vmul.f32 %v120, 0.044715
  %v125 = vmul.f32 %v122, 0.044715
  %v126 = vmul.f32 %v124, %v120
  %v127 = vmul.f32 %v125, %v122
  %v128 = vmul.f32 %v126, %v120
  %v129 = vmul.f32 %v127, %v122
  %v130 = vadd.f32 %v120, %v128
  %v131 = vadd.f32 %v122, %v129
  %v132 = vmul.f32 %v130, 0.7978846
  %v133 = vmul.f32 %v131, 0.7978846
  %v134 = vpack.c.bf16 %v132, %v132
  %v135 = vpack.c.bf16 %v133, %v133
  %v136 = vunpack.c.l.bf16 %v134
  %v137 = vunpack.c.l.bf16 %v135
  %v138 = vtanh.pop %v136
  %v139 = vtanh.pop %v137
  %v140 = vpack.c.bf16 %v138, %v138
  %v141 = vpack.c.bf16 %v139, %v139
  %v142 = vunpack.c.l.bf16 %v140
  %v143 = vunpack.c.l.bf16 %v141
  %v144 = vmul.f32 %v120, 0.5
  %v145 = vmul.f32 %v122, 0.5
  %v146 = vadd.f32 %v142, 1.0
  %v147 = vadd.f32 %v143, 1.0
  %v148 = vmul.f32 %v144, %v146
  %v149 = vmul.f32 %v145, %v147
  %v150 = vpack.c.bf16 %v148, %v148
  %v151 = vpack.c.bf16 %v149, %v149
  %152 = vst [vmem:[%s5] sm:$0xf] %v150
  %153 = vst [vmem:[%s5 + $0x4] sm:$0xf] %v151
  // Predicated region
  $region22: #{gpt_forward.15} parent=0 // pred_check
    _
  $region23: #{gpt_forward.15} parent=0 // pred_check_branch
    %155 = sbr.rel (0) target = $region25
  $region24: #{gpt_forward.15} parent=0 // pred_region
    _
  $region25: #{gpt_forward.15} parent=0 // pred_fallthru
    _
  // Predicated region
  $region26: #{gpt_forward.15} parent=0 // pred_check
    _
  $region27: #{gpt_forward.15} parent=0 // pred_check_branch
    %157 = sbr.rel (0) target = $region29
  $region28: #{gpt_forward.15} parent=0 // pred_region
    _
  $region29: #{gpt_forward.15} parent=0 // pred_fallthru
    _

// kernel: gpt_forward.13
$region0: #{gpt_forward.13}
  #allocation0 [shape = 'u32[]', space=smem, size = 0x4, offset = 0x4, fixed_abs, tag = 'smem constant byte address 0x4 - core index']
  #allocation1 [shape = 'u32[72,128]{1,0:T(1,128)}', space=vmem, size = 0x9000, scoped, tag = 'internal scratch']
  %s0 = inlined_call_operand.vmem [shape: bf16[2,8,96], index: 0, kind: input, shape index: {}]
  %s1 = inlined_call_operand.vmem [shape: bf16[2,8,32], index: 1, kind: output, shape index: {}]
  %s2 = sld [smem:[#allocation0]]
  $region37: #{gpt_forward.13} parent=0
    _
  %s4 = ssub.s32 1, %s2
  %s5 = scalar_select 0, %s4, %s2
  loop: start=0, step=1, limit=4
  $region2: #{gpt_forward.13} parent=0 // loop_pre_header
    _
  $region3: #{gpt_forward.13} parent=0 // loop_header
    %s7 = sphi 0, %s11
    %p8 = scmp.ge.s32.totalorder %s7, 4
    %s17 = sphi 0, %s19
    %s20 = sphi 0, %s17
    %s21 = sphi 0, %s20
    %s37 = sphi 0, %s21
    %s43 = sphi 0, %s45
    %s46 = sphi 0, %s43
    %s47 = sphi 0, %s46
    %s63 = sphi 0, %s47
  $region4: #{gpt_forward.13} parent=0 // loop_header_branch
    %10 = sbr.rel (%p8) target = $region8
  $region5: #{gpt_forward.13} parent=0 // loop_body
    %s12 = ssub.s32 %s7, 1
    %s13 = ssub.s32 %s7, 2
    %s14 = sadd.s32 %s7, 1
    %s15 = ssub.s32 %s7, %s14
    %p16 = scmp.eq.s32.totalorder %s15, 0
    %s18 = sadd.s32 %s17, 1
    %s19 = scalar_select %p16, %s17, %s18
    %p22 = pneg %p16
    %p23 = scmp.eq.s32.totalorder %s7, 1
    %p24 = por %p22, %p23
    %p25 = scmp.ne.s32.totalorder %s17, %s20
    %p26 = scmp.eq.s32.totalorder %s7, 0
    %p27 = por %p25, %p26
    %p28 = scmp.ne.s32.totalorder %s17, %s20
    %p29 = scmp.eq.s32.totalorder %s12, 1
    %p30 = por %p28, %p29
    %p31 = scmp.ne.s32.totalorder %s20, %s21
    %p32 = scmp.eq.s32.totalorder %s12, 0
    %p33 = por %p31, %p32
    %p34 = scmp.ne.s32.totalorder %s20, %s21
    %p35 = scmp.eq.s32.totalorder %s13, 1
    %p36 = por %p34, %p35
    %p38 = scmp.ne.s32.totalorder %s21, %s37
    %p39 = scmp.eq.s32.totalorder %s13, 0
    %p40 = por %p38, %p39
    %s41 = ssub.s32 %s7, %s14
    %p42 = scmp.eq.s32.totalorder %s41, 0
    %s44 = sadd.s32 %s43, 1
    %s45 = scalar_select %p42, %s43, %s44
    %p48 = pneg %p42
    %p49 = scmp.eq.s32.totalorder %s7, 1
    %p50 = por %p48, %p49
    %p51 = scmp.ne.s32.totalorder %s43, %s46
    %p52 = scmp.eq.s32.totalorder %s7, 0
    %p53 = por %p51, %p52
    %p54 = scmp.ne.s32.totalorder %s43, %s46
    %p55 = scmp.eq.s32.totalorder %s12, 1
    %p56 = por %p54, %p55
    %p57 = scmp.ne.s32.totalorder %s46, %s47
    %p58 = scmp.eq.s32.totalorder %s12, 0
    %p59 = por %p57, %p58
    %p60 = scmp.ne.s32.totalorder %s46, %s47
    %p61 = scmp.eq.s32.totalorder %s13, 1
    %p62 = por %p60, %p61
    %p64 = scmp.ne.s32.totalorder %s47, %s63
    %p65 = scmp.eq.s32.totalorder %s13, 0
    %p66 = por %p64, %p65
    %p67 = scmp.le.s32.totalorder 1, %s7
    %p68 = scmp.lt.s32.totalorder %s7, 3
    %p69 = pnand %p67, %p68
    %p70 = pneg %p69
    // Predicated region
    $region9: #{gpt_forward.13} parent=5 // pred_check
      _
    $region10: #{gpt_forward.13} parent=5 // pred_check_branch
      %72 = sbr.rel (%p69) target = $region12
    $region11: #{gpt_forward.13} parent=5 // pred_region
      %s73 = ssub.s32 %s7, 1
    $region12: #{gpt_forward.13} parent=5 // pred_fallthru
      _
    %p74 = scmp.lt.s32.totalorder %s7, 2
    // Predicated region
    $region13: #{gpt_forward.13} parent=5 // pred_check
      %p75 = pneg %p74
    $region14: #{gpt_forward.13} parent=5 // pred_check_branch
      %77 = sbr.rel (%p75) target = $region16
    $region15: #{gpt_forward.13} parent=5 // pred_region
      // Predicated region
      $region17: #{gpt_forward.13} parent=15 // pred_check
        %p78 = pneg %p27
      $region18: #{gpt_forward.13} parent=15 // pred_check_branch
        %80 = sbr.rel (%p78) target = $region20
      $region19: #{gpt_forward.13} parent=15 // pred_region
        %p81 = scmp.lt.s32.totalorder %s7, 1
        %s82 = scalar_select %p81, %s7, 1
        %s83 = smul.addr %s82, 4
        %s84 = scalar_lea.vmem %s0, %s83
      $region20: #{gpt_forward.13} parent=15 // pred_fallthru
        _
    $region16: #{gpt_forward.13} parent=5 // pred_fallthru
      _
    %p85 = scmp.le.s32.totalorder 1, %s7
    %p86 = scmp.lt.s32.totalorder %s7, 3
    %p87 = pnand %p85, %p86
    %p88 = pneg %p87
    // Predicated region
    $region21: #{gpt_forward.13} parent=5 // pred_check
      _
    $region22: #{gpt_forward.13} parent=5 // pred_check_branch
      %90 = sbr.rel (%p87) target = $region24
    $region23: #{gpt_forward.13} parent=5 // pred_region
      %s91 = ssub.s32 %s7, 1
      %p92 = scmp.lt.s32.totalorder %s12, 1
      %s93 = scalar_select %p92, %s12, 1
      %s94 = smul.addr %s93, 4
      %s95 = scalar_lea.vmem %s0, %s94
      %p96 = pneg %p33
      %p97 = pneg %p30
      %p98 = pneg %p59
      %p99 = pneg %p56
      %p100 = scmp.lt.s32.totalorder %s12, 1
      %s101 = scalar_select %p100, %s12, 1
      %s102 = smul.addr %s101, 4
      %s103 = scalar_lea.vmem %s1, %s102
      %p104 = scmp.lt.s32.totalorder %s12, 1
      %s105 = scalar_select %p104, %s12, 1
      %s106 = smul.addr %s105, 4
      %s107 = scalar_lea.vmem %s0, %s106
      %p108 = scmp.lt.s32.totalorder %s12, 1
      %s109 = scalar_select %p108, %s12, 1
      %s110 = smul.addr %s109, 4
      %s111 = scalar_lea.vmem %s1, %s110
      %v113 = vlaneseq
      %v114 = vshrl.u32 %v113, 7
      %v115 = vlaneseq
      %v116 = vand.u32 %v115, 127
      %vm117 = vcmp.le.s32.totalorder %v116, %v114
      %v118 = vld [vmem:[%s107] sm:$0xf]
      %v120 = vunpack.c.l.b16 %v118
      %v121 = vpack.c.b16 %v120, %v120
      %122 = vrot.lane.b32.xlu0 %v121, 96
      %v123 = vpop.permute.xlu0 %122
      %vm124 = vcmask 64512
      %v126 = vsel %vm124, %v118, 0
      %v129 = vsel %vm124, %v123, 0
      %131 = vmatpush.bf16.xpose.msra.mxu0 0
      %132 = vmatpush.bf16.xpose.msra.mxu0 0
      %133 = vmatpush.bf16.xpose.msra.mxu0 0
      %134 = vmatpush.bf16.xpose.msra.mxu0 0
      %135 = vmatpush.bf16.xpose.msra.mxu0 0
      %136 = vmatpush.bf16.xpose.msra.mxu0 0
      %137 = vmatpush.bf16.xpose.msra.mxu0 0
      %138 = vmatpush.bf16.xpose.msra.mxu0 %v129
      %139 = vmatmul.bf16.gmra.mxu0 %v126
      %v140 = vpop.f32.mrf.mxu0
      %v141 = vadd.f32 0.0, %v140
      %v142 = vpop.f32.mrf.mxu0
      %143 = vdwg.mxu0
      %v144 = vmul.f32 %v141, 0.35355338
      %v145 = vsel %vm117, %v144, -1e+30
      %v146 = vsel %vm124, %v145, -inf
      %147 = vmax.xlane.f32.xlu0 %v146
      %v148 = vpop.xlane.xlu0 %147
      %v149 = vsub.f32 %v145, %v148
      %v150 = vmul.f32 %v149, 1.442695
      %v151 = vpow.pop %v150
      %v152 = vsel %vm124, %v151, 0.0
      %153 = vadd.xlane.f32.xlu0 %v152
      %v154 = vpop.xlane.xlu0 %153
      %v155 = vrcp.pop %v154
      %v156 = vmul.f32 %v154, %v155
      %v157 = vsub.f32 1.0, %v156
      %v158 = vmul.f32 %v155, %v157
      %v159 = vadd.f32 %v155, %v158
      %vm160 = vweird.f32 %v154
      %vm161 = vweird.f32 %v155
      %vm162 = vmor %vm160, %vm161
      %v163 = vsel %vm162, %v155, %v159
      %v164 = vand.u32 2147483647, %v154
      %vm165 = vcmp.eq.f32.partialorder %v164, 8.507059e+37
      %v166 = vand.u32 %v154, 2147483648
      %v167 = vor.u32 1.1754944e-38, %v166
      %v168 = vsel %vm165, %v167, %v163
      %v169 = vmul.f32 %v151, %v168
      %v170 = vpack.c.bf16 %v169, %v169
      %171 = vrot.lane.b32.xlu0 %v121, 64
      %v172 = vpop.permute.xlu0 %171
      %v174 = vsel %vm124, %v170, 0
      %vm176 = vcmask 1043456
      %v178 = vsel %vm176, %v172, 0
      %180 = vmatpush.bf16.msra.mxu0 0
      %181 = vmatpush.bf16.msra.mxu0 0
      %182 = vmatpush.bf16.msra.mxu0 0
      %183 = vmatpush.bf16.msra.mxu0 0
      %184 = vmatpush.bf16.msra.mxu0 0
      %185 = vmatpush.bf16.msra.mxu0 0
      %186 = vmatpush.bf16.msra.mxu0 0
      %187 = vmatpush.bf16.msra.mxu0 %v178
      %188 = vmatmul.bf16.gmra.mxu0 %v174
      %v189 = vpop.f32.mrf.mxu0
      %v190 = vadd.f32 0.0, %v189
      %v191 = vpop.f32.mrf.mxu0
      %192 = vdwg.mxu0
      %193 = vrot.lane.b32.xlu0 %v121, 120
      %v194 = vpop.permute.xlu0 %193
      %195 = vrot.lane.b32.xlu0 %v121, 88
      %v196 = vpop.permute.xlu0 %195
      %v198 = vsel %vm124, %v194, 0
      %v201 = vsel %vm124, %v196, 0
      %203 = vmatpush.bf16.xpose.msra.mxu0 0
      %204 = vmatpush.bf16.xpose.msra.mxu0 0
      %205 = vmatpush.bf16.xpose.msra.mxu0 0
      %206 = vmatpush.bf16.xpose.msra.mxu0 0
      %207 = vmatpush.bf16.xpose.msra.mxu0 0
      %208 = vmatpush.bf16.xpose.msra.mxu0 0
      %209 = vmatpush.bf16.xpose.msra.mxu0 0
      %210 = vmatpush.bf16.xpose.msra.mxu0 %v201
      %211 = vmatmul.bf16.gmra.mxu0 %v198
      %v212 = vpop.f32.mrf.mxu0
      %v213 = vadd.f32 0.0, %v212
      %v214 = vpop.f32.mrf.mxu0
      %215 = vdwg.mxu0
      %v216 = vmul.f32 %v213, 0.35355338
      %v217 = vsel %vm117, %v216, -1e+30
      %v218 = vsel %vm124, %v217, -inf
      %219 = vmax.xlane.f32.xlu0 %v218
      %v220 = vpop.xlane.xlu0 %219
      %v221 = vsub.f32 %v217, %v220
      %v222 = vmul.f32 %v221, 1.442695
      %v223 = vpow.pop %v222
      %v224 = vsel %vm124, %v223, 0.0
      %225 = vadd.xlane.f32.xlu0 %v224
      %v226 = vpop.xlane.xlu0 %225
      %v227 = vrcp.pop %v226
      %v228 = vmul.f32 %v226, %v227
      %v229 = vsub.f32 1.0, %v228
      %v230 = vmul.f32 %v227, %v229
      %v231 = vadd.f32 %v227, %v230
      %vm232 = vweird.f32 %v226
      %vm233 = vweird.f32 %v227
      %vm234 = vmor %vm232, %vm233
      %v235 = vsel %vm234, %v227, %v231
      %v236 = vand.u32 2147483647, %v226
      %vm237 = vcmp.eq.f32.partialorder %v236, 8.507059e+37
      %v238 = vand.u32 %v226, 2147483648
      %v239 = vor.u32 1.1754944e-38, %v238
      %v240 = vsel %vm237, %v239, %v235
      %v241 = vmul.f32 %v223, %v240
      %v242 = vpack.c.bf16 %v241, %v241
      %243 = vrot.lane.b32.xlu0 %v121, 56
      %v244 = vpop.permute.xlu0 %243
      %v246 = vsel %vm124, %v242, 0
      %v249 = vsel %vm176, %v244, 0
      %251 = vmatpush.bf16.msra.mxu0 0
      %252 = vmatpush.bf16.msra.mxu0 0
      %253 = vmatpush.bf16.msra.mxu0 0
      %254 = vmatpush.bf16.msra.mxu0 0
      %255 = vmatpush.bf16.msra.mxu0 0
      %256 = vmatpush.bf16.msra.mxu0 0
      %257 = vmatpush.bf16.msra.mxu0 0
      %258 = vmatpush.bf16.msra.mxu0 %v249
      %259 = vmatmul.bf16.gmra.mxu0 %v246
      %v260 = vpop.f32.mrf.mxu0
      %v261 = vadd.f32 0.0, %v260
      %v262 = vpop.f32.mrf.mxu0
      %263 = vdwg.mxu0
      %264 = vrot.lane.b32.xlu0 %v121, 112
      %v265 = vpop.permute.xlu0 %264
      %266 = vrot.lane.b32.xlu0 %v121, 80
      %v267 = vpop.permute.xlu0 %266
      %v269 = vsel %vm124, %v265, 0
      %v272 = vsel %vm124, %v267, 0
      %274 = vmatpush.bf16.xpose.msra.mxu0 0
      %275 = vmatpush.bf16.xpose.msra.mxu0 0
      %276 = vmatpush.bf16.xpose.msra.mxu0 0
      %277 = vmatpush.bf16.xpose.msra.mxu0 0
      %278 = vmatpush.bf16.xpose.msra.mxu0 0
      %279 = vmatpush.bf16.xpose.msra.mxu0 0
      %280 = vmatpush.bf16.xpose.msra.mxu0 0
      %281 = vmatpush.bf16.xpose.msra.mxu0 %v272
      %282 = vmatmul.bf16.gmra.mxu0 %v269
      %v283 = vpop.f32.mrf.mxu0
      %v284 = vadd.f32 0.0, %v283
      %v285 = vpop.f32.mrf.mxu0
      %286 = vdwg.mxu0
      %v287 = vmul.f32 %v284, 0.35355338
      %v288 = vsel %vm117, %v287, -1e+30
      %v289 = vsel %vm124, %v288, -inf
      %290 = vmax.xlane.f32.xlu0 %v289
      %v291 = vpop.xlane.xlu0 %290
      %v292 = vsub.f32 %v288, %v291
      %v293 = vmul.f32 %v292, 1.442695
      %v294 = vpow.pop %v293
      %v295 = vsel %vm124, %v294, 0.0
      %296 = vadd.xlane.f32.xlu0 %v295
      %v297 = vpop.xlane.xlu0 %296
      %v298 = vrcp.pop %v297
      %v299 = vmul.f32 %v297, %v298
      %v300 = vsub.f32 1.0, %v299
      %v301 = vmul.f32 %v298, %v300
      %v302 = vadd.f32 %v298, %v301
      %vm303 = vweird.f32 %v297
      %vm304 = vweird.f32 %v298
      %vm305 = vmor %vm303, %vm304
      %v306 = vsel %vm305, %v298, %v302
      %v307 = vand.u32 2147483647, %v297
      %vm308 = vcmp.eq.f32.partialorder %v307, 8.507059e+37
      %v309 = vand.u32 %v297, 2147483648
      %v310 = vor.u32 1.1754944e-38, %v309
      %v311 = vsel %vm308, %v310, %v306
      %v312 = vmul.f32 %v294, %v311
      %v313 = vpack.c.bf16 %v312, %v312
      %314 = vrot.lane.b32.xlu0 %v121, 48
      %v315 = vpop.permute.xlu0 %314
      %v317 = vsel %vm124, %v313, 0
      %v320 = vsel %vm176, %v315, 0
      %322 = vmatpush.bf16.msra.mxu0 0
      %323 = vmatpush.bf16.msra.mxu0 0
      %324 = vmatpush.bf16.msra.mxu0 0
      %325 = vmatpush.bf16.msra.mxu0 0
      %326 = vmatpush.bf16.msra.mxu0 0
      %327 = vmatpush.bf16.msra.mxu0 0
      %328 = vmatpush.bf16.msra.mxu0 0
      %329 = vmatpush.bf16.msra.mxu0 %v320
      %330 = vmatmul.bf16.gmra.mxu0 %v317
      %v331 = vpop.f32.mrf.mxu0
      %v332 = vadd.f32 0.0, %v331
      %v333 = vpop.f32.mrf.mxu0
      %334 = vdwg.mxu0
      %335 = vrot.lane.b32.xlu0 %v121, 104
      %v336 = vpop.permute.xlu0 %335
      %337 = vrot.lane.b32.xlu0 %v121, 72
      %v338 = vpop.permute.xlu0 %337
      %v340 = vsel %vm124, %v336, 0
      %v343 = vsel %vm124, %v338, 0
      %345 = vmatpush.bf16.xpose.msra.mxu0 0
      %346 = vmatpush.bf16.xpose.msra.mxu0 0
      %347 = vmatpush.bf16.xpose.msra.mxu0 0
      %348 = vmatpush.bf16.xpose.msra.mxu0 0
      %349 = vmatpush.bf16.xpose.msra.mxu0 0
      %350 = vmatpush.bf16.xpose.msra.mxu0 0
      %351 = vmatpush.bf16.xpose.msra.mxu0 0
      %352 = vmatpush.bf16.xpose.msra.mxu0 %v343
      %353 = vmatmul.bf16.gmra.mxu0 %v340
      %v354 = vpop.f32.mrf.mxu0
      %v355 = vadd.f32 0.0, %v354
      %v356 = vpop.f32.mrf.mxu0
      %357 = vdwg.mxu0
      %v358 = vmul.f32 %v355, 0.35355338
      %v359 = vsel %vm117, %v358, -1e+30
      %v360 = vsel %vm124, %v359, -inf
      %361 = vmax.xlane.f32.xlu0 %v360
      %v362 = vpop.xlane.xlu0 %361
      %v363 = vsub.f32 %v359, %v362
      %v364 = vmul.f32 %v363, 1.442695
      %v365 = vpow.pop %v364
      %v366 = vsel %vm124, %v365, 0.0
      %367 = vadd.xlane.f32.xlu0 %v366
      %v368 = vpop.xlane.xlu0 %367
      %v369 = vrcp.pop %v368
      %v370 = vmul.f32 %v368, %v369
      %v371 = vsub.f32 1.0, %v370
      %v372 = vmul.f32 %v369, %v371
      %v373 = vadd.f32 %v369, %v372
      %vm374 = vweird.f32 %v368
      %vm375 = vweird.f32 %v369
      %vm376 = vmor %vm374, %vm375
      %v377 = vsel %vm376, %v369, %v373
      %v378 = vand.u32 2147483647, %v368
      %vm379 = vcmp.eq.f32.partialorder %v378, 8.507059e+37
      %v380 = vand.u32 %v368, 2147483648
      %v381 = vor.u32 1.1754944e-38, %v380
      %v382 = vsel %vm379, %v381, %v377
      %v383 = vmul.f32 %v365, %v382
      %v384 = vpack.c.bf16 %v383, %v383
      %385 = vrot.lane.b32.xlu0 %v121, 40
      %v386 = vpop.permute.xlu0 %385
      %v388 = vsel %vm124, %v384, 0
      %v391 = vsel %vm176, %v386, 0
      %393 = vmatpush.bf16.msra.mxu0 0
      %394 = vmatpush.bf16.msra.mxu0 0
      %395 = vmatpush.bf16.msra.mxu0 0
      %396 = vmatpush.bf16.msra.mxu0 0
      %397 = vmatpush.bf16.msra.mxu0 0
      %398 = vmatpush.bf16.msra.mxu0 0
      %399 = vmatpush.bf16.msra.mxu0 0
      %400 = vmatpush.bf16.msra.mxu0 %v391
      %401 = vmatmul.bf16.gmra.mxu0 %v388
      %v402 = vpop.f32.mrf.mxu0
      %v403 = vadd.f32 0.0, %v402
      %v404 = vpop.f32.mrf.mxu0
      %405 = vdwg.mxu0
      %407 = vrot.lane.b32.xlu0 %v261, 8
      %v408 = vpop.permute.xlu0 %407
      %411 = vrot.lane.b32.xlu0 %v332, 16
      %v412 = vpop.permute.xlu0 %411
      %415 = vrot.lane.b32.xlu0 %v403, 24
      %v416 = vpop.permute.xlu0 %415
      %v418 = vsel %vm124, %v190, %v408
      %vm419 = vcmask 130048
      %v420 = vsel %vm419, %v418, %v412
      %vm421 = vcmask 195584
      %v422 = vsel %vm421, %v420, %v416
      %v423 = vpack.c.bf16 %v422, %v422
      %vm424 = vcmask 257024
      %425 = vst.msk [vmem:[%s111] sm:$0xf] %vm424, %v423
      %p426 = scmp.lt.s32.totalorder %s12, 1
      %s427 = scalar_select %p426, %s12, 1
      %s428 = smul.addr %s427, 4
      %s429 = scalar_lea.vmem %s1, %s428
      // Predicated region
      $region25: #{gpt_forward.13} parent=23 // pred_check
        %p430 = pneg %p56
      $region26: #{gpt_forward.13} parent=23 // pred_check_branch
        %432 = sbr.rel (%p430) target = $region28
      $region27: #{gpt_forward.13} parent=23 // pred_region
        _
      $region28: #{gpt_forward.13} parent=23 // pred_fallthru
        _
    $region24: #{gpt_forward.13} parent=5 // pred_fallthru
      _
    %p433 = scmp.le.s32.totalorder 2, %s7
    // Predicated region
    $region29: #{gpt_forward.13} parent=5 // pred_check
      %p434 = pneg %p433
    $region30: #{gpt_forward.13} parent=5 // pred_check_branch
      %436 = sbr.rel (%p434) target = $region32
    $region31: #{gpt_forward.13} parent=5 // pred_region
      %s437 = ssub.s32 %s7, 2
      // Predicated region
      $region33: #{gpt_forward.13} parent=31 // pred_check
        %p438 = pneg %p62
      $region34: #{gpt_forward.13} parent=31 // pred_check_branch
        %440 = sbr.rel (%p438) target = $region36
      $region35: #{gpt_forward.13} parent=31 // pred_region
        %p441 = scmp.lt.s32.totalorder %s13, 1
        %s442 = scalar_select %p441, %s13, 1
        %s443 = smul.addr %s442, 4
        %s444 = scalar_lea.vmem %s1, %s443
      $region36: #{gpt_forward.13} parent=31 // pred_fallthru
        _
    $region32: #{gpt_forward.13} parent=5 // pred_fallthru
      _
  $region6: #{gpt_forward.13} parent=0 // loop_footer
    %s11 = sadd.s32 1, %s7
  $region7: #{gpt_forward.13} parent=0 // loop_footer_branch
    %6 = sbr.rel target = $region3
  $region8: #{gpt_forward.13} parent=0 // loop_exit
    _

// kernel: gpt_forward.22
$region0: #{gpt_forward.22}
  #allocation0 [shape = 'u32[]', space=smem, size = 0x4, offset = 0x4, fixed_abs, tag = 'smem constant byte address 0x4 - core index']
  #allocation1 [shape = 'u32[72,128]{1,0:T(1,128)}', space=vmem, size = 0x9000, scoped, tag = 'internal scratch']
  %s0 = inlined_call_operand.vmem [shape: bf16[16,32], index: 0, kind: input, shape index: {}]
  %s1 = inlined_call_operand.vmem [shape: bf16[1,32], index: 1, kind: input, shape index: {}]
  %s2 = inlined_call_operand.vmem [shape: bf16[1,32], index: 2, kind: input, shape index: {}]
  %s3 = inlined_call_operand.vmem [shape: bf16[16,32], index: 3, kind: output, shape index: {}]
  %s4 = sld [smem:[#allocation0]]
  $region22: #{gpt_forward.22} parent=0
    _
  %s6 = ssub.s32 1, %s4
  %s7 = scalar_select 0, %s6, %s4
  // Predicated region
  $region2: #{gpt_forward.22} parent=0 // pred_check
    _
  $region3: #{gpt_forward.22} parent=0 // pred_check_branch
    %9 = sbr.rel (0) target = $region5
  $region4: #{gpt_forward.22} parent=0 // pred_region
    _
  $region5: #{gpt_forward.22} parent=0 // pred_fallthru
    _
  // Predicated region
  $region6: #{gpt_forward.22} parent=0 // pred_check
    _
  $region7: #{gpt_forward.22} parent=0 // pred_check_branch
    %11 = sbr.rel (0) target = $region9
  $region8: #{gpt_forward.22} parent=0 // pred_region
    _
  $region9: #{gpt_forward.22} parent=0 // pred_fallthru
    _
  // Predicated region
  $region10: #{gpt_forward.22} parent=0 // pred_check
    _
  $region11: #{gpt_forward.22} parent=0 // pred_check_branch
    %13 = sbr.rel (0) target = $region13
  $region12: #{gpt_forward.22} parent=0 // pred_region
    _
  $region13: #{gpt_forward.22} parent=0 // pred_fallthru
    _
  %v14 = vld [vmem:[%s0] sm:$0xf]
  %v15 = vld [vmem:[%s0 + $0x4] sm:$0xf]
  %v16 = vunpack.c.l.bf16 %v14
  %v17 = vunpack.c.l.bf16 %v15
  %vm18 = vcmask 261120
  %v19 = vsel %vm18, %v16, 0.0
  %20 = vadd.xlane.f32.xlu0 %v19
  %v21 = vpop.xlane.xlu0 %20
  %v22 = vsel %vm18, %v17, 0.0
  %23 = vadd.xlane.f32.xlu0 %v22
  %v24 = vpop.xlane.xlu0 %23
  %v25 = vrcp.pop 32.0
  %v26 = vmul.f32 32.0, %v25
  %v27 = vsub.f32 1.0, %v26
  %v28 = vmul.f32 %v25, %v27
  %v29 = vadd.f32 %v25, %v28
  %vm30 = vweird.f32 %v25
  %v31 = vsel %vm30, %v25, %v29
  %v32 = vmul.f32 %v21, %v31
  %v33 = vmul.f32 %v24, %v31
  %v34 = vsub.f32 %v16, %v32
  %v35 = vsub.f32 %v17, %v33
  %v36 = vmul.f32 %v34, %v34
  %v37 = vmul.f32 %v35, %v35
  %v38 = vsel %vm18, %v36, 0.0
  %39 = vadd.xlane.f32.xlu0 %v38
  %v40 = vpop.xlane.xlu0 %39
  %v41 = vsel %vm18, %v37, 0.0
  %42 = vadd.xlane.f32.xlu0 %v41
  %v43 = vpop.xlane.xlu0 %42
  %v44 = vmul.f32 %v40, %v31
  %v45 = vmul.f32 %v43, %v31
  %v46 = vadd.f32 %v44, 1e-05
  %v47 = vadd.f32 %v45, 1e-05
  %v48 = vrsqrt.pop %v46
  %v49 = vmul.f32 %v48, %v46
  %v50 = vmul.f32 %v49, %v48
  %v51 = vmul.f32 0.5, %v50
  %v52 = vsub.f32 1.5, %v51
  %v53 = vmul.f32 %v48, %v52
  %vm54 = vweird.f32 %v46
  %vm55 = vweird.f32 %v48
  %vm56 = vmor %vm54, %vm55
  %v57 = vsel %vm56, %v48, %v53
  %v58 = vrsqrt.pop %v47
  %v59 = vmul.f32 %v58, %v47
  %v60 = vmul.f32 %v59, %v58
  %v61 = vmul.f32 0.5, %v60
  %v62 = vsub.f32 1.5, %v61
  %v63 = vmul.f32 %v58, %v62
  %vm64 = vweird.f32 %v47
  %vm65 = vweird.f32 %v58
  %vm66 = vmor %vm64, %vm65
  %v67 = vsel %vm66, %v58, %v63
  %v68 = vmul.f32 %v34, %v57
  %v69 = vmul.f32 %v35, %v67
  %v70 = vld [vmem:[%s1] sm:$0x1]
  %v71 = vunpack.c.l.bf16 %v70
  %v72 = vperm.slane %v71, 0
  %v73 = vmul.f32 %v68, %v72
  %v74 = vmul.f32 %v69, %v72
  %v75 = vld [vmem:[%s2] sm:$0x1]
  %v76 = vunpack.c.l.bf16 %v75
  %v77 = vperm.slane %v76, 0
  %v78 = vadd.f32 %v73, %v77
  %v79 = vadd.f32 %v74, %v77
  %v80 = vpack.c.bf16 %v78, %v78
  %v81 = vpack.c.bf16 %v79, %v79
  %vm82 = vcmask 257024
  %83 = vst.msk [vmem:[%s3] sm:$0xf] %vm82, %v80
  %84 = vst.msk [vmem:[%s3 + $0x4] sm:$0xf] %vm82, %v81
  // Predicated region
  $region14: #{gpt_forward.22} parent=0 // pred_check
    _
  $region15: #{gpt_forward.22} parent=0 // pred_check_branch
    %86 = sbr.rel (0) target = $region17
  $region16: #{gpt_forward.22} parent=0 // pred_region
    _
  $region17: #{gpt_forward.22} parent=0 // pred_fallthru
    _
  // Predicated region
  $region18: #{gpt_forward.22} parent=0 // pred_check
    _
  $region19: #{gpt_forward.22} parent=0 // pred_check_branch
    %88 = sbr.rel (0) target = $region21
  $region20: #{gpt_forward.22} parent=0 // pred_region
    _
  $region21: #{gpt_forward.22} parent=0 // pred_fallthru
    _

// kernel: gpt_forward.23
$region0: #{gpt_forward.23}
  #allocation0 [shape = 'u32[]', space=smem, size = 0x4, offset = 0x4, fixed_abs, tag = 'smem constant byte address 0x4 - core index']
  #allocation1 [shape = 'u32[72,128]{1,0:T(1,128)}', space=vmem, size = 0x9000, scoped, tag = 'internal scratch']
  %s0 = inlined_call_operand.vmem [shape: bf16[16,32], index: 0, kind: input, shape index: {}]
  %s1 = inlined_call_operand.vmem [shape: bf16[32,128], index: 1, kind: input, shape index: {}]
  %s2 = inlined_call_operand.hbm [shape: f32[16,128], index: 2, kind: output, shape index: {}]
  %s3 = sld [smem:[#allocation0]]
  $region18: #{gpt_forward.23} parent=0
    _
  %s5 = ssub.s32 1, %s3
  %s6 = scalar_select 0, %s5, %s3
  $region1: #{gpt_forward.23} parent=0
    #allocation2 [shape = 'u8[8192]{0}', space=vmem, size = 0x2000, scoped, tag = 'output window, operand 0, single buffered']
    #allocation3 [shape = 's32[1]{0}', space=sflag, size = 0x4, scoped, tag = 'scoped memory for gpt_forward.23']
    %7 = vsyncpa [#allocation3], 0
    // Predicated region
    $region2: #{gpt_forward.23} parent=1 // pred_check
      _
    $region3: #{gpt_forward.23} parent=1 // pred_check_branch
      %9 = sbr.rel (0) target = $region5
    $region4: #{gpt_forward.23} parent=1 // pred_region
      _
    $region5: #{gpt_forward.23} parent=1 // pred_fallthru
      _
    // Predicated region
    $region6: #{gpt_forward.23} parent=1 // pred_check
      _
    $region7: #{gpt_forward.23} parent=1 // pred_check_branch
      %11 = sbr.rel (0) target = $region9
    $region8: #{gpt_forward.23} parent=1 // pred_region
      _
    $region9: #{gpt_forward.23} parent=1 // pred_fallthru
      _
    %v13 = vld [vmem:[%s0] sm:$0xf]
    %v14 = vld [vmem:[%s0 + $0x4] sm:$0xf]
    %v15 = vld [vmem:[%s1] sm:$0xf]
    %v16 = vld [vmem:[%s1 + $0x4] sm:$0xf]
    %v17 = vld [vmem:[%s1 + $0x8] sm:$0xf]
    %v18 = vld [vmem:[%s1 + $0xc] sm:$0xf]
    %v21 = vunpack.c.l.b16 %v13
    %v22 = vunpack.c.l.b16 %v14
    %v23 = vpack.c.b16 %v22, %v21
    %v28 = vunpack.c.l.b16 %v15
    %v29 = vunpack.c.l.b16 %v16
    %v30 = vunpack.c.l.b16 %v17
    %v31 = vunpack.c.l.b16 %v18
    %v32 = vpack.c.b16 %v29, %v28
    %v33 = vpack.c.b16 %v31, %v30
    %vm36 = vcmask 261120
    %v38 = vsel %vm36, %v23, 0
    %40 = vmatpush.bf16.msra.mxu0 0
    %41 = vmatpush.bf16.msra.mxu0 0
    %42 = vmatpush.bf16.msra.mxu0 0
    %43 = vmatpush.bf16.msra.mxu0 0
    %44 = vmatpush.bf16.msra.mxu0 0
    %45 = vmatpush.bf16.msra.mxu0 0
    %46 = vmatpush.bf16.msra.mxu0 %v33
    %47 = vmatpush.bf16.msra.mxu0 %v32
    %48 = vmatmul.bf16.gmra.mxu0 %v38
    %v49 = vpop.f32.mrf.mxu0
    %v50 = vadd.f32 0.0, %v49
    %v51 = vpop.f32.mrf.mxu0
    %v52 = vadd.f32 0.0, %v51
    %53 = vdwg.mxu0
    %54 = vst [vmem:[#allocation2] sm:$0xff] %v50
    %55 = vst [vmem:[#allocation2 + $0x8] sm:$0xff] %v52
    // Predicated region
    $region10: #{gpt_forward.23} parent=1 // pred_check
      _
    $region11: #{gpt_forward.23} parent=1 // pred_check_branch
      %57 = sbr.rel (0) target = $region13
    $region12: #{gpt_forward.23} parent=1 // pred_region
      %59 = vsyncadd [#allocation3], 0
      %s60 = sshll.u32 [#allocation2], 4
      %s61 = int_to_ptr.vmem [resolvable:$true] %s60
      %s62 = sshll.u32 %s2, 4
      %s63 = int_to_ptr.hbm [resolvable:$true] %s62
      %68 = dma.vmem_to_hbm [thread:$0]  %s61, 256, %s63, [#allocation3], 128, 128, 8
    $region13: #{gpt_forward.23} parent=1 // pred_fallthru
      _
    // Predicated region
    $region14: #{gpt_forward.23} parent=1 // pred_check
      _
    $region15: #{gpt_forward.23} parent=1 // pred_check_branch
      %70 = sbr.rel (0) target = $region17
    $region16: #{gpt_forward.23} parent=1 // pred_region
      %72 = dma.done [#allocation3], 256
    $region17: #{gpt_forward.23} parent=1 // pred_fallthru
      _
    %73 = vsyncpa [#allocation3], 1

// kernel: gpt_forward.16
$region0: #{gpt_forward.16}
  #allocation0 [shape = 'u32[]', space=smem, size = 0x4, offset = 0x4, fixed_abs, tag = 'smem constant byte address 0x4 - core index']
  #allocation1 [shape = 'u32[72,128]{1,0:T(1,128)}', space=vmem, size = 0x9000, scoped, tag = 'internal scratch']
  %s0 = inlined_call_operand.vmem [shape: bf16[16,128], index: 0, kind: input, shape index: {}]
  %s1 = inlined_call_operand.vmem [shape: bf16[128,32], index: 1, kind: input, shape index: {}]
  %s2 = inlined_call_operand.vmem [shape: bf16[1,32], index: 2, kind: input, shape index: {}]
  %s3 = inlined_call_operand.vmem [shape: bf16[16,32], index: 3, kind: input, shape index: {}]
  %s4 = inlined_call_operand.vmem [shape: bf16[16,32], index: 4, kind: output, shape index: {}]
  %s5 = sld [smem:[#allocation0]]
  $region26: #{gpt_forward.16} parent=0
    _
  %s7 = ssub.s32 1, %s5
  %s8 = scalar_select 0, %s7, %s5
  // Predicated region
  $region2: #{gpt_forward.16} parent=0 // pred_check
    _
  $region3: #{gpt_forward.16} parent=0 // pred_check_branch
    %10 = sbr.rel (0) target = $region5
  $region4: #{gpt_forward.16} parent=0 // pred_region
    _
  $region5: #{gpt_forward.16} parent=0 // pred_fallthru
    _
  // Predicated region
  $region6: #{gpt_forward.16} parent=0 // pred_check
    _
  $region7: #{gpt_forward.16} parent=0 // pred_check_branch
    %12 = sbr.rel (0) target = $region9
  $region8: #{gpt_forward.16} parent=0 // pred_region
    _
  $region9: #{gpt_forward.16} parent=0 // pred_fallthru
    _
  // Predicated region
  $region10: #{gpt_forward.16} parent=0 // pred_check
    _
  $region11: #{gpt_forward.16} parent=0 // pred_check_branch
    %14 = sbr.rel (0) target = $region13
  $region12: #{gpt_forward.16} parent=0 // pred_region
    _
  $region13: #{gpt_forward.16} parent=0 // pred_fallthru
    _
  // Predicated region
  $region14: #{gpt_forward.16} parent=0 // pred_check
    _
  $region15: #{gpt_forward.16} parent=0 // pred_check_branch
    %16 = sbr.rel (0) target = $region17
  $region16: #{gpt_forward.16} parent=0 // pred_region
    _
  $region17: #{gpt_forward.16} parent=0 // pred_fallthru
    _
  %v17 = vld [vmem:[%s0] sm:$0xf]
  %v18 = vld [vmem:[%s0 + $0x4] sm:$0xf]
  %v19 = vld [vmem:[%s1] sm:$0xf]
  %v20 = vld [vmem:[%s1 + $0x4] sm:$0xf]
  %v21 = vld [vmem:[%s1 + $0x8] sm:$0xf]
  %v22 = vld [vmem:[%s1 + $0xc] sm:$0xf]
  %v23 = vld [vmem:[%s1 + $0x10] sm:$0xf]
  %v24 = vld [vmem:[%s1 + $0x14] sm:$0xf]
  %v25 = vld [vmem:[%s1 + $0x18] sm:$0xf]
  %v26 = vld [vmem:[%s1 + $0x1c] sm:$0xf]
  %v27 = vld [vmem:[%s1 + $0x20] sm:$0xf]
  %v28 = vld [vmem:[%s1 + $0x24] sm:$0xf]
  %v29 = vld [vmem:[%s1 + $0x28] sm:$0xf]
  %v30 = vld [vmem:[%s1 + $0x2c] sm:$0xf]
  %v31 = vld [vmem:[%s1 + $0x30] sm:$0xf]
  %v32 = vld [vmem:[%s1 + $0x34] sm:$0xf]
  %v33 = vld [vmem:[%s1 + $0x38] sm:$0xf]
  %v34 = vld [vmem:[%s1 + $0x3c] sm:$0xf]
  %v35 = vld [vmem:[%s2] sm:$0x1]
  %v36 = vunpack.c.l.bf16 %v35
  %v37 = vperm.slane %v36, 0
  %v40 = vunpack.c.l.b16 %v17
  %v41 = vunpack.c.l.b16 %v18
  %v42 = vpack.c.b16 %v41, %v40
  %v60 = vunpack.c.l.b16 %v19
  %v61 = vunpack.c.l.b16 %v20
  %v62 = vunpack.c.l.b16 %v21
  %v63 = vunpack.c.l.b16 %v22
  %v64 = vunpack.c.l.b16 %v23
  %v65 = vunpack.c.l.b16 %v24
  %v66 = vunpack.c.l.b16 %v25
  %v67 = vunpack.c.l.b16 %v26
  %v68 = vunpack.c.l.b16 %v27
  %v69 = vunpack.c.l.b16 %v28
  %v70 = vunpack.c.l.b16 %v29
  %v71 = vunpack.c.l.b16 %v30
  %v72 = vunpack.c.l.b16 %v31
  %v73 = vunpack.c.l.b16 %v32
  %v74 = vunpack.c.l.b16 %v33
  %v75 = vunpack.c.l.b16 %v34
  %v76 = vpack.c.b16 %v61, %v60
  %v77 = vpack.c.b16 %v63, %v62
  %v78 = vpack.c.b16 %v65, %v64
  %v79 = vpack.c.b16 %v67, %v66
  %v80 = vpack.c.b16 %v69, %v68
  %v81 = vpack.c.b16 %v71, %v70
  %v82 = vpack.c.b16 %v73, %v72
  %v83 = vpack.c.b16 %v75, %v74
  %92 = vmatpush.bf16.msra.mxu0 %v83
  %93 = vmatpush.bf16.msra.mxu0 %v82
  %94 = vmatpush.bf16.msra.mxu0 %v81
  %95 = vmatpush.bf16.msra.mxu0 %v80
  %96 = vmatpush.bf16.msra.mxu0 %v79
  %97 = vmatpush.bf16.msra.mxu0 %v78
  %98 = vmatpush.bf16.msra.mxu0 %v77
  %99 = vmatpush.bf16.msra.mxu0 %v76
  %100 = vmatmul.bf16.gmra.mxu0 %v42
  %v101 = vpop.f32.mrf.mxu0
  %v102 = vadd.f32 %v37, %v101
  %v103 = vpop.f32.mrf.mxu0
  %v104 = vadd.f32 %v37, %v103
  %105 = vdwg.mxu0
  %v106 = vld [vmem:[%s3] sm:$0xf]
  %v107 = vld [vmem:[%s3 + $0x4] sm:$0xf]
  %v108 = vunpack.c.l.bf16 %v106
  %v109 = vunpack.c.l.bf16 %v107
  %v110 = vadd.f32 %v102, %v108
  %v111 = vadd.f32 %v104, %v109
  %v112 = vpack.c.bf16 %v110, %v110
  %v113 = vpack.c.bf16 %v111, %v111
  %vm114 = vcmask 257024
  %115 = vst.msk [vmem:[%s4] sm:$0xf] %vm114, %v112
  %116 = vst.msk [vmem:[%s4 + $0x4] sm:$0xf] %vm114, %v113
  // Predicated region
  $region18: #{gpt_forward.16} parent=0 // pred_check
    _
  $region19: #{gpt_forward.16} parent=0 // pred_check_branch
    %118 = sbr.rel (0) target = $region21
  $region20: #{gpt_forward.16} parent=0 // pred_region
    _
  $region21: #{gpt_forward.16} parent=0 // pred_fallthru
    _
  // Predicated region
  $region22: #{gpt_forward.16} parent=0 // pred_check
    _
  $region23: #{gpt_forward.16} parent=0 // pred_check_branch
    %120 = sbr.rel (0) target = $region25
  $region24: #{gpt_forward.16} parent=0 // pred_region
    _
  $region25: #{gpt_forward.16} parent=0 // pred_fallthru
    _

</llo_original>
